<compile_context>
chip_gen: v7x
topology: tpu7x:2x2x1
jax: 0.10.0
libtpu: 0.0.40
codegen_flags: <defaults>
</compile_context>

<pallas_src>
import numpy as np
import jax
import jax.numpy as jnp
from jax.experimental import pallas as pl
from jax.experimental.pallas import tpu as pltpu

# ---------------- static network configuration ----------------
MULTIRES = 4
D_IN = 3
D_OUT = 1
WIDTH = 64
DEPTH = 4
SKIP_IN = 2
BIAS = 1.0

INPUT_CH = D_IN * (1 + 2 * MULTIRES)           # 27
DIMS = [INPUT_CH] + [WIDTH] * DEPTH + [D_OUT]  # [27, 64, 64, 64, 64, 1]
NUM_LAYERS = len(DIMS)                         # 6 -> 5 linear layers
# log-sampled frequency bands: 2**linspace(0, multires-1, multires) = [1,2,4,8]
FREQS = [float(f) for f in 2.0 ** np.linspace(0.0, MULTIRES - 1, MULTIRES)]

SQRT2 = float(np.sqrt(2.0))
TM_MAX = 4096                # points per grid step (lane axis)
EMB_GROUP = 4                # rows per frequency group in the padded embed slab
EMB_ROWS = EMB_GROUP * MULTIRES   # 16


def _round_up(x, m):
    return ((x + m - 1) // m) * m


def _softplus100(y):
    # nn.Softplus(beta=100, threshold=20): (1/beta)*log1p(exp(beta*x)),
    # linear when beta*x > 20.  Clamp before exp so the discarded branch is finite.
    t = y * 100.0
    z = jnp.minimum(t, 20.0)
    return jnp.where(t > 20.0, y, jnp.log1p(jnp.exp(z)) * 0.01)


# ---------------- Pallas kernel: the whole MLP hot path ----------------
def _mlp_kernel(xe_ref,
                w0x, w0s, w0c, b0,
                w1, b1,
                w2a, w2x, w2s, w2c, b2,
                w3, b3,
                w4, b4,
                o_ref):
    mdt = w1.dtype                       # matmul operand dtype (bf16 fast path / f32)
    xe = xe_ref[...]                     # (16, TM) f32: rows [f*x0,f*x1,f*x2,0] per freq
    sn = jnp.sin(xe)                     # one EUP pass on an 8-aligned slab
    cs = jnp.cos(xe)                     # (pad rows give sin=0 / cos=1; weight cols are 0)
    xe_m = xe.astype(mdt)
    sn_m = sn.astype(mdt)
    cs_m = cs.astype(mdt)

    def dot(w_ref, h):
        return jnp.dot(w_ref[...], h, preferred_element_type=jnp.float32)

    # layer 0: embed (27, presented as x/sin/cos slabs) -> 64
    h = _softplus100(dot(w0x, xe_m) + dot(w0s, sn_m) + dot(w0c, cs_m) + b0[...])
    # layer 1: 64 -> 37 (rows zero-padded to 40; pad rows meet zero cols of w2a)
    h = _softplus100(dot(w1, h.astype(mdt)) + b1[...])
    # layer 2 (skip): softplus(W2[:, :37]/sqrt2 @ h + W2[:, 37:]/sqrt2 @ embed + b2)
    # (concat and 1/sqrt(2) folded into pre-split weights; MXU accumulates partials)
    h = _softplus100(dot(w2a, h.astype(mdt)) + dot(w2x, xe_m)
                     + dot(w2s, sn_m) + dot(w2c, cs_m) + b2[...])
    # layer 3: 64 -> 64
    h = _softplus100(dot(w3, h.astype(mdt)) + b3[...])
    # layer 4 (last): 64 -> 1, no activation; kept f32; lane-dense (1, TM) store
    o_ref[...] = (jnp.dot(w4[...], h, preferred_element_type=jnp.float32)
                  + b4[...]).astype(o_ref.dtype)


# ---------------- parameter construction (geometric init) ----------------
def init_params(key):
    """Returns list of (W (out,in), b (out,)) effective weights (PyTorch layout)."""
    params = []
    for l in range(NUM_LAYERS - 1):
        in_dim = DIMS[l]
        out_dim = DIMS[l + 1] - DIMS[0] if (l + 1) == SKIP_IN else DIMS[l + 1]
        key, k1 = jax.random.split(key)
        if l == NUM_LAYERS - 2:
            # last layer: normal(mean=-sqrt(pi)/sqrt(in_dim), std=1e-4), bias=BIAS
            w = (-np.sqrt(np.pi) / np.sqrt(in_dim)
                 + 1e-4 * jax.random.normal(k1, (out_dim, in_dim)))
            b = jnp.full((out_dim,), BIAS, dtype=jnp.float32)
        elif l == 0:
            # multires > 0 and l == 0: zeros, first 3 input cols gaussian
            w = jnp.zeros((out_dim, in_dim))
            w = w.at[:, :D_IN].set(
                jax.random.normal(k1, (out_dim, D_IN)) * np.sqrt(2) / np.sqrt(out_dim))
            b = jnp.zeros((out_dim,), dtype=jnp.float32)
        elif l == SKIP_IN:
            # multires > 0 and l == skip_in: gaussian, zero last (input_ch-3) cols
            w = jax.random.normal(k1, (out_dim, in_dim)) * np.sqrt(2) / np.sqrt(out_dim)
            w = w.at[:, -(INPUT_CH - D_IN):].set(0.0)
            b = jnp.zeros((out_dim,), dtype=jnp.float32)
        else:
            w = jax.random.normal(k1, (out_dim, in_dim)) * np.sqrt(2) / np.sqrt(out_dim)
            b = jnp.zeros((out_dim,), dtype=jnp.float32)
        params.append((w.astype(jnp.float32), b.astype(jnp.float32)))
    return params


def _split_embed_cols(w):
    """w: (out, 27) in PyTorch embed order [x, sin(f0 x), cos(f0 x), sin(f1 x), ...].
    Returns (wx, ws, wc), each (out, 16), matching the kernel's padded slabs where
    slab row 4k+j holds coordinate j at frequency k and row 4k+3 is padding."""
    out = w.shape[0]
    wx = jnp.zeros((out, EMB_ROWS), jnp.float32)
    ws = jnp.zeros((out, EMB_ROWS), jnp.float32)
    wc = jnp.zeros((out, EMB_ROWS), jnp.float32)
    wx = wx.at[:, 0:D_IN].set(w[:, 0:D_IN])          # include_input part (f0 == 1)
    for k in range(MULTIRES):
        s0 = D_IN + 2 * D_IN * k                      # sin(f_k x) columns
        c0 = 2 * D_IN + 2 * D_IN * k                  # cos(f_k x) columns
        ws = ws.at[:, EMB_GROUP * k:EMB_GROUP * k + D_IN].set(w[:, s0:s0 + D_IN])
        wc = wc.at[:, EMB_GROUP * k:EMB_GROUP * k + D_IN].set(w[:, c0:c0 + D_IN])
    return wx, ws, wc


def prepare_kernel_params(params, matmul_dtype=jnp.bfloat16):
    """Convert PyTorch-layout params into kernel operands:
       * W0 / embed-part-of-W2 split into x/sin/cos column blocks over the
         padded (16-row) embed slabs (zero columns at pad rows)
       * W2 split into h-part (W2a) and embed-part, both pre-scaled by 1/sqrt(2)
       * layer-1 output padded 37 -> 40 (zero rows; matching zero cols in W2a)
       * hidden-layer weights cast to matmul_dtype (bf16 fast path); last layer
         and all biases stay f32; biases reshaped to (out, 1) for lane broadcast"""
    (w0, b0), (w1, b1), (w2, b2), (w3, b3), (w4, b4) = params
    h1 = w1.shape[0]                     # 37
    h1p = _round_up(h1, 8)               # 40

    w0x, w0s, w0c = _split_embed_cols(w0)
    w1p = jnp.zeros((h1p, w1.shape[1]), jnp.float32).at[:h1, :].set(w1)
    b1p = jnp.zeros((h1p,), jnp.float32).at[:h1].set(b1)
    w2a = jnp.zeros((w2.shape[0], h1p), jnp.float32).at[:, :h1].set(w2[:, :h1] / SQRT2)
    w2x, w2s, w2c = _split_embed_cols(w2[:, h1:] / SQRT2)

    md = matmul_dtype
    col = lambda b: b.reshape(-1, 1).astype(jnp.float32)
    return [w0x.astype(md), w0s.astype(md), w0c.astype(md), col(b0),
            w1p.astype(md), col(b1p),
            w2a.astype(md), w2x.astype(md), w2s.astype(md), w2c.astype(md), col(b2),
            w3.astype(md), col(b3),
            w4.astype(jnp.float32), col(b4)]


def _build_xe(x_t, m_pad):
    """x_t: (3, M) f32 feature-major points -> (16, m_pad) slab with rows
    [f*x0, f*x1, f*x2, 0] per frequency f in FREQS (f0 == 1 doubles as the
    include_input part).  Built host-side so the kernel sees only 8-aligned slabs."""
    m = x_t.shape[1]
    zero = jnp.zeros((EMB_GROUP - D_IN, m), jnp.float32)
    rows = []
    for f in FREQS:
        rows.append(x_t * f)
        rows.append(zero)
    xe = jnp.concatenate(rows, axis=0)
    if m_pad != m:
        xe = jnp.pad(xe, ((0, 0), (0, m_pad - m)))
    return xe


# ---------------- wrapper ----------------
def implicit_network_forward(x, params, tm=TM_MAX, matmul_dtype=jnp.bfloat16):
    """x: (B, N, 3) float32 query points; mask assumed all-True (no compaction).
    Returns (B, N, d_out) float32."""
    B, N, _ = x.shape
    M = B * N
    # Big tiles amortize the ~0.35 us/step overhead; shrink for tiny inputs so
    # the grid keeps >= 2 steps, and keep the step count even so both v7x
    # TensorCores stay balanced under dimension_semantics=("parallel",).
    tm = max(128, min(tm, _round_up(pl.cdiv(M, 2), 128)))
    M_pad = _round_up(M, tm)
    steps = M_pad // tm
    if steps > 1 and steps % 2 == 1:
        M_pad = _round_up(M, 2 * tm)
        steps = M_pad // tm

    x_t = x.reshape(M, D_IN).astype(jnp.float32).T     # (3, M) feature-major
    xe = _build_xe(x_t, M_pad)                          # (16, M_pad)
    kparams = prepare_kernel_params(params, matmul_dtype)

    in_specs = [pl.BlockSpec((EMB_ROWS, tm), lambda i: (0, i))]
    for p in kparams:
        # full-array (replicated) blocks for weights & biases; constant index map
        in_specs.append(pl.BlockSpec(p.shape, lambda i: (0, 0)))

    out = pl.pallas_call(
        _mlp_kernel,
        out_shape=jax.ShapeDtypeStruct((D_OUT, M_pad), jnp.float32),
        grid_spec=pltpu.PrefetchScalarGridSpec(
            num_scalar_prefetch=0,
            grid=(steps,),
            in_specs=in_specs,
            out_specs=pl.BlockSpec((D_OUT, tm), lambda i: (0, i)),
        ),
        compiler_params=pltpu.CompilerParams(
            dimension_semantics=("parallel",),
            vmem_limit_bytes=32 * 1024 * 1024),  # v5e scoped default is only 16 MiB
    )(xe, *kparams)

    # TODO(synk): boolean-mask compaction (input[mask]) / val_pad scatter-back for
    # partially-masked batches is data-dependent gather/scatter; not implemented
    # in-kernel (mask assumed all-True, so scatter-back == reshape).
    return out[:, :M].T.reshape(B, N, D_OUT)


# ---------------- pure-JAX references (for self-check) ----------------
def _positional_embed_ref(x):
    # PyTorch Embedder ordering: [x, sin(f0 x), cos(f0 x), sin(f1 x), ...]
    parts = [x]
    for f in FREQS:
        parts.append(jnp.sin(x * f))
        parts.append(jnp.cos(x * f))
    return jnp.concatenate(parts, axis=-1)  # (..., 27)


def ref_forward(x, params, matmul_dtype=None):
    """matmul_dtype=None  -> exact PyTorch-equivalent f32 forward.
       matmul_dtype=bf16  -> emulates the kernel's precision choice: hidden-layer
       matmul operands cast to bf16 (1/sqrt(2) folded into the weight), f32
       accumulation, f32 softplus, f32 last layer."""
    B, N, _ = x.shape
    xf = x.reshape(B * N, D_IN).astype(jnp.float32)
    embed = _positional_embed_ref(xf)
    h = embed
    n_lin = len(params)
    for l, (w, b) in enumerate(params):
        if l == SKIP_IN:
            if matmul_dtype is None:
                inp = jnp.concatenate([h, embed], axis=-1) / SQRT2
                w_eff = w
            else:
                inp = jnp.concatenate([h, embed], axis=-1)
                w_eff = w / SQRT2          # kernel folds 1/sqrt(2) into the weights
        else:
            inp, w_eff = h, w
        if matmul_dtype is not None and l < n_lin - 1:
            inp = inp.astype(matmul_dtype)
            w_eff = w_eff.astype(matmul_dtype)
        y = jnp.dot(inp, w_eff.T, preferred_element_type=jnp.float32) + b
        h = _softplus100(y) if l < n_lin - 1 else y
    return h.reshape(B, N, D_OUT)


if __name__ == "__main__":
    key = jax.random.PRNGKey(0)
    kp, kx = jax.random.split(key)

    params = init_params(kp)

    B, N = 2, 128                     # M = 256 points -> 2 tiles of 128
    x = jax.random.uniform(kx, (B, N, D_IN), dtype=jnp.float32,
                           minval=-1.0, maxval=1.0)

    # 1) bf16-MXU fast path (default) vs a reference applying identical bf16
    #    rounding at the matmul operands (validates layout/permutation/padding).
    out_bf = jax.block_until_ready(implicit_network_forward(x, params))
    ref_bf = jax.block_until_ready(ref_forward(x, params, matmul_dtype=jnp.bfloat16))
    assert out_bf.shape == (B, N, D_OUT)
    np.testing.assert_allclose(np.asarray(out_bf), np.asarray(ref_bf),
                               rtol=1e-3, atol=1e-3)

    # 2) f32 matmul path vs the exact PyTorch-equivalent forward.
    out_f32 = jax.block_until_ready(
        implicit_network_forward(x, params, matmul_dtype=jnp.float32))
    ref_f32 = jax.block_until_ready(ref_forward(x, params, matmul_dtype=None))
    np.testing.assert_allclose(np.asarray(out_f32), np.asarray(ref_f32),
                               rtol=1e-4, atol=1e-4)

    print("KERNEL_OK")
</pallas_src>

<mosaic_0001>
module attributes {stable_mosaic.version = 11 : i64} {
  func.func @_mlp_kernel(%arg0: i32, %arg1: memref<16x128xf32, #tpu.memory_space<vmem>>, %arg2: memref<64x16xbf16, #tpu.memory_space<vmem>>, %arg3: memref<64x16xbf16, #tpu.memory_space<vmem>>, %arg4: memref<64x16xbf16, #tpu.memory_space<vmem>>, %arg5: memref<64x1xf32, #tpu.memory_space<vmem>>, %arg6: memref<40x64xbf16, #tpu.memory_space<vmem>>, %arg7: memref<40x1xf32, #tpu.memory_space<vmem>>, %arg8: memref<64x40xbf16, #tpu.memory_space<vmem>>, %arg9: memref<64x16xbf16, #tpu.memory_space<vmem>>, %arg10: memref<64x16xbf16, #tpu.memory_space<vmem>>, %arg11: memref<64x16xbf16, #tpu.memory_space<vmem>>, %arg12: memref<64x1xf32, #tpu.memory_space<vmem>>, %arg13: memref<64x64xbf16, #tpu.memory_space<vmem>>, %arg14: memref<64x1xf32, #tpu.memory_space<vmem>>, %arg15: memref<1x64xf32, #tpu.memory_space<vmem>>, %arg16: memref<1x1xf32, #tpu.memory_space<vmem>>, %arg17: memref<1x128xf32, #tpu.memory_space<vmem>>) attributes {dimension_semantics = [#tpu.dimension_semantics<parallel>], iteration_bounds = array<i64: 2>, scalar_prefetch = 0 : i64, scratch_operands = 0 : i64, tpu.core_type = #tpu.core_type<tc>, window_params = [{transform_indices = @transform_0, window_bounds = array<i64: 16, 128>}, {pipeline_mode = #tpu.pipeline_mode<synchronous>, transform_indices = @transform_1, window_bounds = array<i64: 64, 16>}, {pipeline_mode = #tpu.pipeline_mode<synchronous>, transform_indices = @transform_2, window_bounds = array<i64: 64, 16>}, {pipeline_mode = #tpu.pipeline_mode<synchronous>, transform_indices = @transform_3, window_bounds = array<i64: 64, 16>}, {pipeline_mode = #tpu.pipeline_mode<synchronous>, transform_indices = @transform_4, window_bounds = array<i64: 64, 1>}, {pipeline_mode = #tpu.pipeline_mode<synchronous>, transform_indices = @transform_5, window_bounds = array<i64: 40, 64>}, {pipeline_mode = #tpu.pipeline_mode<synchronous>, transform_indices = @transform_6, window_bounds = array<i64: 40, 1>}, {pipeline_mode = #tpu.pipeline_mode<synchronous>, transform_indices = @transform_7, window_bounds = array<i64: 64, 40>}, {pipeline_mode = #tpu.pipeline_mode<synchronous>, transform_indices = @transform_8, window_bounds = array<i64: 64, 16>}, {pipeline_mode = #tpu.pipeline_mode<synchronous>, transform_indices = @transform_9, window_bounds = array<i64: 64, 16>}, {pipeline_mode = #tpu.pipeline_mode<synchronous>, transform_indices = @transform_10, window_bounds = array<i64: 64, 16>}, {pipeline_mode = #tpu.pipeline_mode<synchronous>, transform_indices = @transform_11, window_bounds = array<i64: 64, 1>}, {pipeline_mode = #tpu.pipeline_mode<synchronous>, transform_indices = @transform_12, window_bounds = array<i64: 64, 64>}, {pipeline_mode = #tpu.pipeline_mode<synchronous>, transform_indices = @transform_13, window_bounds = array<i64: 64, 1>}, {pipeline_mode = #tpu.pipeline_mode<synchronous>, transform_indices = @transform_14, window_bounds = array<i64: 1, 64>}, {pipeline_mode = #tpu.pipeline_mode<synchronous>, transform_indices = @transform_15, window_bounds = array<i64: 1, 1>}, {transform_indices = @transform_16, window_bounds = array<i64: 1, 128>}]} {
    %c0 = arith.constant 0 : index
    %c0_0 = arith.constant 0 : index
    %0 = vector.load %arg1[%c0, %c0_0] : memref<16x128xf32, #tpu.memory_space<vmem>>, vector<16x128xf32>
    %1 = math.sin %0 : vector<16x128xf32>
    %2 = math.cos %0 : vector<16x128xf32>
    %3 = arith.truncf %0 : vector<16x128xf32> to vector<16x128xbf16>
    %4 = arith.truncf %1 : vector<16x128xf32> to vector<16x128xbf16>
    %5 = arith.truncf %2 : vector<16x128xf32> to vector<16x128xbf16>
    %c0_1 = arith.constant 0 : index
    %c0_2 = arith.constant 0 : index
    %6 = vector.load %arg2[%c0_1, %c0_2] : memref<64x16xbf16, #tpu.memory_space<vmem>>, vector<64x16xbf16>
    %cst = arith.constant dense<0.000000e+00> : vector<64x128xf32>
    %7 = tpu.matmul %6, %3, %cst {dimension_numbers = #tpu.dot_dimension_numbers<[1], [0], [0], [1], [0, 0, 1, 1], [], []>} : vector<64x16xbf16>, vector<16x128xbf16>, vector<64x128xf32> -> vector<64x128xf32>
    %c0_3 = arith.constant 0 : index
    %c0_4 = arith.constant 0 : index
    %8 = vector.load %arg3[%c0_3, %c0_4] : memref<64x16xbf16, #tpu.memory_space<vmem>>, vector<64x16xbf16>
    %cst_5 = arith.constant dense<0.000000e+00> : vector<64x128xf32>
    %9 = tpu.matmul %8, %4, %cst_5 {dimension_numbers = #tpu.dot_dimension_numbers<[1], [0], [0], [1], [0, 0, 1, 1], [], []>} : vector<64x16xbf16>, vector<16x128xbf16>, vector<64x128xf32> -> vector<64x128xf32>
    %10 = arith.addf %7, %9 : vector<64x128xf32>
    %c0_6 = arith.constant 0 : index
    %c0_7 = arith.constant 0 : index
    %11 = vector.load %arg4[%c0_6, %c0_7] : memref<64x16xbf16, #tpu.memory_space<vmem>>, vector<64x16xbf16>
    %cst_8 = arith.constant dense<0.000000e+00> : vector<64x128xf32>
    %12 = tpu.matmul %11, %5, %cst_8 {dimension_numbers = #tpu.dot_dimension_numbers<[1], [0], [0], [1], [0, 0, 1, 1], [], []>} : vector<64x16xbf16>, vector<16x128xbf16>, vector<64x128xf32> -> vector<64x128xf32>
    %13 = arith.addf %10, %12 : vector<64x128xf32>
    %c0_9 = arith.constant 0 : index
    %c0_10 = arith.constant 0 : index
    %14 = vector.load %arg5[%c0_9, %c0_10] : memref<64x1xf32, #tpu.memory_space<vmem>>, vector<64x1xf32>
    %15 = vector.broadcast %14 : vector<64x1xf32> to vector<64x128xf32>
    %16 = arith.addf %13, %15 : vector<64x128xf32>
    %cst_11 = arith.constant 1.000000e+02 : f32
    %17 = vector.broadcast %cst_11 : f32 to vector<64x128xf32>
    %18 = arith.mulf %16, %17 : vector<64x128xf32>
    %cst_12 = arith.constant 2.000000e+01 : f32
    %19 = vector.broadcast %cst_12 : f32 to vector<64x128xf32>
    %20 = arith.minimumf %18, %19 : vector<64x128xf32>
    %cst_13 = arith.constant 2.000000e+01 : f32
    %21 = vector.broadcast %cst_13 : f32 to vector<64x128xf32>
    %22 = arith.cmpf ogt, %18, %21 : vector<64x128xf32>
    %23 = math.exp %20 : vector<64x128xf32>
    %24 = math.log1p %23 : vector<64x128xf32>
    %cst_14 = arith.constant 0.00999999977 : f32
    %25 = vector.broadcast %cst_14 : f32 to vector<64x128xf32>
    %26 = arith.mulf %24, %25 : vector<64x128xf32>
    %27 = arith.select %22, %16, %26 : vector<64x128xi1>, vector<64x128xf32>
    %28 = arith.truncf %27 : vector<64x128xf32> to vector<64x128xbf16>
    %c0_15 = arith.constant 0 : index
    %c0_16 = arith.constant 0 : index
    %29 = vector.load %arg6[%c0_15, %c0_16] : memref<40x64xbf16, #tpu.memory_space<vmem>>, vector<40x64xbf16>
    %cst_17 = arith.constant dense<0.000000e+00> : vector<40x128xf32>
    %30 = tpu.matmul %29, %28, %cst_17 {dimension_numbers = #tpu.dot_dimension_numbers<[1], [0], [0], [1], [0, 0, 1, 1], [], []>} : vector<40x64xbf16>, vector<64x128xbf16>, vector<40x128xf32> -> vector<40x128xf32>
    %c0_18 = arith.constant 0 : index
    %c0_19 = arith.constant 0 : index
    %31 = vector.load %arg7[%c0_18, %c0_19] : memref<40x1xf32, #tpu.memory_space<vmem>>, vector<40x1xf32>
    %32 = vector.broadcast %31 : vector<40x1xf32> to vector<40x128xf32>
    %33 = arith.addf %30, %32 : vector<40x128xf32>
    %cst_20 = arith.constant 1.000000e+02 : f32
    %34 = vector.broadcast %cst_20 : f32 to vector<40x128xf32>
    %35 = arith.mulf %33, %34 : vector<40x128xf32>
    %cst_21 = arith.constant 2.000000e+01 : f32
    %36 = vector.broadcast %cst_21 : f32 to vector<40x128xf32>
    %37 = arith.minimumf %35, %36 : vector<40x128xf32>
    %cst_22 = arith.constant 2.000000e+01 : f32
    %38 = vector.broadcast %cst_22 : f32 to vector<40x128xf32>
    %39 = arith.cmpf ogt, %35, %38 : vector<40x128xf32>
    %40 = math.exp %37 : vector<40x128xf32>
    %41 = math.log1p %40 : vector<40x128xf32>
    %cst_23 = arith.constant 0.00999999977 : f32
    %42 = vector.broadcast %cst_23 : f32 to vector<40x128xf32>
    %43 = arith.mulf %41, %42 : vector<40x128xf32>
    %44 = arith.select %39, %33, %43 : vector<40x128xi1>, vector<40x128xf32>
    %45 = arith.truncf %44 : vector<40x128xf32> to vector<40x128xbf16>
    %c0_24 = arith.constant 0 : index
    %c0_25 = arith.constant 0 : index
    %46 = vector.load %arg8[%c0_24, %c0_25] : memref<64x40xbf16, #tpu.memory_space<vmem>>, vector<64x40xbf16>
    %cst_26 = arith.constant dense<0.000000e+00> : vector<64x128xf32>
    %47 = tpu.matmul %46, %45, %cst_26 {dimension_numbers = #tpu.dot_dimension_numbers<[1], [0], [0], [1], [0, 0, 1, 1], [], []>} : vector<64x40xbf16>, vector<40x128xbf16>, vector<64x128xf32> -> vector<64x128xf32>
    %c0_27 = arith.constant 0 : index
    %c0_28 = arith.constant 0 : index
    %48 = vector.load %arg9[%c0_27, %c0_28] : memref<64x16xbf16, #tpu.memory_space<vmem>>, vector<64x16xbf16>
    %cst_29 = arith.constant dense<0.000000e+00> : vector<64x128xf32>
    %49 = tpu.matmul %48, %3, %cst_29 {dimension_numbers = #tpu.dot_dimension_numbers<[1], [0], [0], [1], [0, 0, 1, 1], [], []>} : vector<64x16xbf16>, vector<16x128xbf16>, vector<64x128xf32> -> vector<64x128xf32>
    %50 = arith.addf %47, %49 : vector<64x128xf32>
    %c0_30 = arith.constant 0 : index
    %c0_31 = arith.constant 0 : index
    %51 = vector.load %arg10[%c0_30, %c0_31] : memref<64x16xbf16, #tpu.memory_space<vmem>>, vector<64x16xbf16>
    %cst_32 = arith.constant dense<0.000000e+00> : vector<64x128xf32>
    %52 = tpu.matmul %51, %4, %cst_32 {dimension_numbers = #tpu.dot_dimension_numbers<[1], [0], [0], [1], [0, 0, 1, 1], [], []>} : vector<64x16xbf16>, vector<16x128xbf16>, vector<64x128xf32> -> vector<64x128xf32>
    %53 = arith.addf %50, %52 : vector<64x128xf32>
    %c0_33 = arith.constant 0 : index
    %c0_34 = arith.constant 0 : index
    %54 = vector.load %arg11[%c0_33, %c0_34] : memref<64x16xbf16, #tpu.memory_space<vmem>>, vector<64x16xbf16>
    %cst_35 = arith.constant dense<0.000000e+00> : vector<64x128xf32>
    %55 = tpu.matmul %54, %5, %cst_35 {dimension_numbers = #tpu.dot_dimension_numbers<[1], [0], [0], [1], [0, 0, 1, 1], [], []>} : vector<64x16xbf16>, vector<16x128xbf16>, vector<64x128xf32> -> vector<64x128xf32>
    %56 = arith.addf %53, %55 : vector<64x128xf32>
    %c0_36 = arith.constant 0 : index
    %c0_37 = arith.constant 0 : index
    %57 = vector.load %arg12[%c0_36, %c0_37] : memref<64x1xf32, #tpu.memory_space<vmem>>, vector<64x1xf32>
    %58 = vector.broadcast %57 : vector<64x1xf32> to vector<64x128xf32>
    %59 = arith.addf %56, %58 : vector<64x128xf32>
    %cst_38 = arith.constant 1.000000e+02 : f32
    %60 = vector.broadcast %cst_38 : f32 to vector<64x128xf32>
    %61 = arith.mulf %59, %60 : vector<64x128xf32>
    %cst_39 = arith.constant 2.000000e+01 : f32
    %62 = vector.broadcast %cst_39 : f32 to vector<64x128xf32>
    %63 = arith.minimumf %61, %62 : vector<64x128xf32>
    %cst_40 = arith.constant 2.000000e+01 : f32
    %64 = vector.broadcast %cst_40 : f32 to vector<64x128xf32>
    %65 = arith.cmpf ogt, %61, %64 : vector<64x128xf32>
    %66 = math.exp %63 : vector<64x128xf32>
    %67 = math.log1p %66 : vector<64x128xf32>
    %cst_41 = arith.constant 0.00999999977 : f32
    %68 = vector.broadcast %cst_41 : f32 to vector<64x128xf32>
    %69 = arith.mulf %67, %68 : vector<64x128xf32>
    %70 = arith.select %65, %59, %69 : vector<64x128xi1>, vector<64x128xf32>
    %71 = arith.truncf %70 : vector<64x128xf32> to vector<64x128xbf16>
    %c0_42 = arith.constant 0 : index
    %c0_43 = arith.constant 0 : index
    %72 = vector.load %arg13[%c0_42, %c0_43] : memref<64x64xbf16, #tpu.memory_space<vmem>>, vector<64x64xbf16>
    %cst_44 = arith.constant dense<0.000000e+00> : vector<64x128xf32>
    %73 = tpu.matmul %72, %71, %cst_44 {dimension_numbers = #tpu.dot_dimension_numbers<[1], [0], [0], [1], [0, 0, 1, 1], [], []>} : vector<64x64xbf16>, vector<64x128xbf16>, vector<64x128xf32> -> vector<64x128xf32>
    %c0_45 = arith.constant 0 : index
    %c0_46 = arith.constant 0 : index
    %74 = vector.load %arg14[%c0_45, %c0_46] : memref<64x1xf32, #tpu.memory_space<vmem>>, vector<64x1xf32>
    %75 = vector.broadcast %74 : vector<64x1xf32> to vector<64x128xf32>
    %76 = arith.addf %73, %75 : vector<64x128xf32>
    %cst_47 = arith.constant 1.000000e+02 : f32
    %77 = vector.broadcast %cst_47 : f32 to vector<64x128xf32>
    %78 = arith.mulf %76, %77 : vector<64x128xf32>
    %cst_48 = arith.constant 2.000000e+01 : f32
    %79 = vector.broadcast %cst_48 : f32 to vector<64x128xf32>
    %80 = arith.minimumf %78, %79 : vector<64x128xf32>
    %cst_49 = arith.constant 2.000000e+01 : f32
    %81 = vector.broadcast %cst_49 : f32 to vector<64x128xf32>
    %82 = arith.cmpf ogt, %78, %81 : vector<64x128xf32>
    %83 = math.exp %80 : vector<64x128xf32>
    %84 = math.log1p %83 : vector<64x128xf32>
    %cst_50 = arith.constant 0.00999999977 : f32
    %85 = vector.broadcast %cst_50 : f32 to vector<64x128xf32>
    %86 = arith.mulf %84, %85 : vector<64x128xf32>
    %87 = arith.select %82, %76, %86 : vector<64x128xi1>, vector<64x128xf32>
    %c0_51 = arith.constant 0 : index
    %c0_52 = arith.constant 0 : index
    %88 = vector.load %arg15[%c0_51, %c0_52] : memref<1x64xf32, #tpu.memory_space<vmem>>, vector<1x64xf32>
    %cst_53 = arith.constant dense<0.000000e+00> : vector<1x128xf32>
    %89 = tpu.matmul %88, %87, %cst_53 {dimension_numbers = #tpu.dot_dimension_numbers<[1], [0], [0], [1], [0, 0, 1, 1], [], []>} : vector<1x64xf32>, vector<64x128xf32>, vector<1x128xf32> -> vector<1x128xf32>
    %c0_54 = arith.constant 0 : index
    %c0_55 = arith.constant 0 : index
    %90 = vector.load %arg16[%c0_54, %c0_55] : memref<1x1xf32, #tpu.memory_space<vmem>>, vector<1x1xf32>
    %91 = vector.broadcast %90 : vector<1x1xf32> to vector<1x128xf32>
    %92 = arith.addf %89, %91 : vector<1x128xf32>
    %c0_56 = arith.constant 0 : index
    %c0_57 = arith.constant 0 : index
    %93 = vector.load %arg17[%c0_56, %c0_57] : memref<1x128xf32, #tpu.memory_space<vmem>>, vector<1x128xf32>
    tpu.vector_store %arg17[%c0_56, %c0_57], %92 {strides = array<i32>} : memref<1x128xf32, #tpu.memory_space<vmem>>, vector<1x128xf32>,
    return
  }
  func.func @transform_0(%arg0: i32) -> (i32, i32) {
    %c0_i32 = arith.constant 0 : i32
    %c0_i32_0 = arith.constant 0 : i32
    return %c0_i32, %arg0 : i32, i32
  }
  func.func @transform_1(%arg0: i32) -> (i32, i32) {
    %c0_i32 = arith.constant 0 : i32
    %c0_i32_0 = arith.constant 0 : i32
    %c0_i32_1 = arith.constant 0 : i32
    return %c0_i32, %c0_i32_0 : i32, i32
  }
  func.func @transform_2(%arg0: i32) -> (i32, i32) {
    %c0_i32 = arith.constant 0 : i32
    %c0_i32_0 = arith.constant 0 : i32
    %c0_i32_1 = arith.constant 0 : i32
    return %c0_i32, %c0_i32_0 : i32, i32
  }
  func.func @transform_3(%arg0: i32) -> (i32, i32) {
    %c0_i32 = arith.constant 0 : i32
    %c0_i32_0 = arith.constant 0 : i32
    %c0_i32_1 = arith.constant 0 : i32
    return %c0_i32, %c0_i32_0 : i32, i32
  }
  func.func @transform_4(%arg0: i32) -> (i32, i32) {
    %c0_i32 = arith.constant 0 : i32
    %c0_i32_0 = arith.constant 0 : i32
    %c0_i32_1 = arith.constant 0 : i32
    return %c0_i32, %c0_i32_0 : i32, i32
  }
  func.func @transform_5(%arg0: i32) -> (i32, i32) {
    %c0_i32 = arith.constant 0 : i32
    %c0_i32_0 = arith.constant 0 : i32
    %c0_i32_1 = arith.constant 0 : i32
    return %c0_i32, %c0_i32_0 : i32, i32
  }
  func.func @transform_6(%arg0: i32) -> (i32, i32) {
    %c0_i32 = arith.constant 0 : i32
    %c0_i32_0 = arith.constant 0 : i32
    %c0_i32_1 = arith.constant 0 : i32
    return %c0_i32, %c0_i32_0 : i32, i32
  }
  func.func @transform_7(%arg0: i32) -> (i32, i32) {
    %c0_i32 = arith.constant 0 : i32
    %c0_i32_0 = arith.constant 0 : i32
    %c0_i32_1 = arith.constant 0 : i32
    return %c0_i32, %c0_i32_0 : i32, i32
  }
  func.func @transform_8(%arg0: i32) -> (i32, i32) {
    %c0_i32 = arith.constant 0 : i32
    %c0_i32_0 = arith.constant 0 : i32
    %c0_i32_1 = arith.constant 0 : i32
    return %c0_i32, %c0_i32_0 : i32, i32
  }
  func.func @transform_9(%arg0: i32) -> (i32, i32) {
    %c0_i32 = arith.constant 0 : i32
    %c0_i32_0 = arith.constant 0 : i32
    %c0_i32_1 = arith.constant 0 : i32
    return %c0_i32, %c0_i32_0 : i32, i32
  }
  func.func @transform_10(%arg0: i32) -> (i32, i32) {
    %c0_i32 = arith.constant 0 : i32
    %c0_i32_0 = arith.constant 0 : i32
    %c0_i32_1 = arith.constant 0 : i32
    return %c0_i32, %c0_i32_0 : i32, i32
  }
  func.func @transform_11(%arg0: i32) -> (i32, i32) {
    %c0_i32 = arith.constant 0 : i32
    %c0_i32_0 = arith.constant 0 : i32
    %c0_i32_1 = arith.constant 0 : i32
    return %c0_i32, %c0_i32_0 : i32, i32
  }
  func.func @transform_12(%arg0: i32) -> (i32, i32) {
    %c0_i32 = arith.constant 0 : i32
    %c0_i32_0 = arith.constant 0 : i32
    %c0_i32_1 = arith.constant 0 : i32
    return %c0_i32, %c0_i32_0 : i32, i32
  }
  func.func @transform_13(%arg0: i32) -> (i32, i32) {
    %c0_i32 = arith.constant 0 : i32
    %c0_i32_0 = arith.constant 0 : i32
    %c0_i32_1 = arith.constant 0 : i32
    return %c0_i32, %c0_i32_0 : i32, i32
  }
  func.func @transform_14(%arg0: i32) -> (i32, i32) {
    %c0_i32 = arith.constant 0 : i32
    %c0_i32_0 = arith.constant 0 : i32
    %c0_i32_1 = arith.constant 0 : i32
    return %c0_i32, %c0_i32_0 : i32, i32
  }
  func.func @transform_15(%arg0: i32) -> (i32, i32) {
    %c0_i32 = arith.constant 0 : i32
    %c0_i32_0 = arith.constant 0 : i32
    %c0_i32_1 = arith.constant 0 : i32
    return %c0_i32, %c0_i32_0 : i32, i32
  }
  func.func @transform_16(%arg0: i32) -> (i32, i32) {
    %c0_i32 = arith.constant 0 : i32
    %c0_i32_0 = arith.constant 0 : i32
    return %c0_i32, %arg0 : i32, i32
  }
}

</mosaic_0001>

<llo_original>
// kernel: tpu_custom_call.1
$region0: #{tpu_custom_call.1}
  #allocation0 [shape = 'u32[]', space=smem, size = 0x4, offset = 0x4, fixed_abs, tag = 'smem constant byte address 0x4 - core index']
  #allocation1 [shape = 'u32[144,128]{1,0:T(1,128)}', space=vmem, size = 0x12000, scoped, tag = 'internal scratch']
  #allocation2 [shape = 'f32[1,1]{1,0:T(1,128)S(1)}', space=vmem, size = 0x200, scoped, tag = 'scoped memory for tpu_custom_call.1']
  %s0 = inlined_call_operand.vmem [shape: f32[16,256], index: 0, kind: input, shape index: {}]
  %s1 = inlined_call_operand.vmem [shape: bf16[64,16], index: 1, kind: input, shape index: {}]
  %s2 = inlined_call_operand.vmem [shape: bf16[64,16], index: 2, kind: input, shape index: {}]
  %s3 = inlined_call_operand.vmem [shape: bf16[64,16], index: 3, kind: input, shape index: {}]
  %s4 = inlined_call_operand.vmem [shape: f32[64,1], index: 4, kind: input, shape index: {}]
  %s5 = inlined_call_operand.vmem [shape: bf16[40,64], index: 5, kind: input, shape index: {}]
  %s6 = inlined_call_operand.vmem [shape: f32[40,1], index: 6, kind: input, shape index: {}]
  %s7 = inlined_call_operand.vmem [shape: bf16[64,40], index: 7, kind: input, shape index: {}]
  %s8 = inlined_call_operand.vmem [shape: bf16[64,16], index: 8, kind: input, shape index: {}]
  %s9 = inlined_call_operand.vmem [shape: bf16[64,16], index: 9, kind: input, shape index: {}]
  %s10 = inlined_call_operand.vmem [shape: bf16[64,16], index: 10, kind: input, shape index: {}]
  %s11 = inlined_call_operand.vmem [shape: f32[64,1], index: 11, kind: input, shape index: {}]
  %s12 = inlined_call_operand.vmem [shape: bf16[64,64], index: 12, kind: input, shape index: {}]
  %s13 = inlined_call_operand.vmem [shape: f32[64,1], index: 13, kind: input, shape index: {}]
  %s14 = inlined_call_operand.vmem [shape: f32[1,64], index: 14, kind: input, shape index: {}]
  %s15 = inlined_call_operand.<no memory space> [shape: f32[1,1], index: 15, kind: input, shape index: {}]
  %s16 = inlined_call_operand.hbm [shape: f32[1,256], index: 16, kind: output, shape index: {}]
  %s17 = sld [smem:[#allocation0]]
  $region135: #{tpu_custom_call.1} parent=0
    _
  %s19 = ssub.s32 1, %s17
  %s20 = scalar_select 0, %s19, %s17
  %v21 = vstv %s15
  %22 = vst [vmem:[#allocation2] sm:$0x1] %v21
  $region1: #{tpu_custom_call.1} parent=0
    #allocation3 [shape = 'u8[16384]{0}', space=vmem, size = 0x4000, scoped, tag = 'input window, operand 0']
    #allocation4 [shape = 'u8[1024]{0}', space=vmem, size = 0x400, scoped, tag = 'output window, operand 0']
    #allocation5 [shape = 's32[2]{0}', space=sflag, size = 0x8, scoped, tag = 'scoped memory for tpu_custom_call.1']
    %23 = vsyncpa [#allocation5], 0
    %s24 = scalar_lea.sflag [#allocation5], 1
    %25 = vsyncpa %s24, 0
    loop: start=0, step=1, limit=4
    $region2: #{tpu_custom_call.1} parent=1 // loop_pre_header
      _
    $region3: #{tpu_custom_call.1} parent=1 // loop_header
      %s27 = sphi 0, %s31
      %p28 = scmp.ge.s32.totalorder %s27, 4
      %s37 = sphi 0, %s39
      %s40 = sphi 0, %s37
      %s41 = sphi 0, %s40
      %s57 = sphi 0, %s41
      %s61 = sphi 0, %s61
      %s63 = sphi 0, %s61
      %s64 = sphi 0, %s63
      %s78 = sphi 0, %s64
      %s82 = sphi 0, %s82
      %s84 = sphi 0, %s82
      %s85 = sphi 0, %s84
      %s99 = sphi 0, %s85
      %s103 = sphi 0, %s103
      %s105 = sphi 0, %s103
      %s106 = sphi 0, %s105
      %s120 = sphi 0, %s106
      %s124 = sphi 0, %s124
      %s126 = sphi 0, %s124
      %s127 = sphi 0, %s126
      %s141 = sphi 0, %s127
      %s145 = sphi 0, %s145
      %s147 = sphi 0, %s145
      %s148 = sphi 0, %s147
      %s162 = sphi 0, %s148
      %s166 = sphi 0, %s166
      %s168 = sphi 0, %s166
      %s169 = sphi 0, %s168
      %s183 = sphi 0, %s169
      %s187 = sphi 0, %s187
      %s189 = sphi 0, %s187
      %s190 = sphi 0, %s189
      %s204 = sphi 0, %s190
      %s208 = sphi 0, %s208
      %s210 = sphi 0, %s208
      %s211 = sphi 0, %s210
      %s225 = sphi 0, %s211
      %s229 = sphi 0, %s229
      %s231 = sphi 0, %s229
      %s232 = sphi 0, %s231
      %s246 = sphi 0, %s232
      %s250 = sphi 0, %s250
      %s252 = sphi 0, %s250
      %s253 = sphi 0, %s252
      %s267 = sphi 0, %s253
      %s271 = sphi 0, %s271
      %s273 = sphi 0, %s271
      %s274 = sphi 0, %s273
      %s288 = sphi 0, %s274
      %s292 = sphi 0, %s292
      %s294 = sphi 0, %s292
      %s295 = sphi 0, %s294
      %s309 = sphi 0, %s295
      %s313 = sphi 0, %s313
      %s315 = sphi 0, %s313
      %s316 = sphi 0, %s315
      %s330 = sphi 0, %s316
      %s334 = sphi 0, %s334
      %s336 = sphi 0, %s334
      %s337 = sphi 0, %s336
      %s351 = sphi 0, %s337
      %s355 = sphi 0, %s355
      %s357 = sphi 0, %s355
      %s358 = sphi 0, %s357
      %s372 = sphi 0, %s358
      %s378 = sphi 0, %s380
      %s381 = sphi 0, %s378
      %s382 = sphi 0, %s381
      %s398 = sphi 0, %s382
    $region4: #{tpu_custom_call.1} parent=1 // loop_header_branch
      %30 = sbr.rel (%p28) target = $region8
    $region5: #{tpu_custom_call.1} parent=1 // loop_body
      %s32 = ssub.s32 %s27, 1
      %s33 = ssub.s32 %s27, 2
      %s34 = sadd.s32 %s27, 1
      %s35 = ssub.s32 %s27, %s34
      %p36 = scmp.eq.s32.totalorder %s35, 0
      %s38 = sadd.s32 %s37, 1
      %s39 = scalar_select %p36, %s37, %s38
      %p42 = pneg %p36
      %p43 = scmp.eq.s32.totalorder %s27, 1
      %p44 = por %p42, %p43
      %p45 = scmp.ne.s32.totalorder %s37, %s40
      %p46 = scmp.eq.s32.totalorder %s27, 0
      %p47 = por %p45, %p46
      %p48 = scmp.ne.s32.totalorder %s37, %s40
      %p49 = scmp.eq.s32.totalorder %s32, 1
      %p50 = por %p48, %p49
      %p51 = scmp.ne.s32.totalorder %s40, %s41
      %p52 = scmp.eq.s32.totalorder %s32, 0
      %p53 = por %p51, %p52
      %p54 = scmp.ne.s32.totalorder %s40, %s41
      %p55 = scmp.eq.s32.totalorder %s33, 1
      %p56 = por %p54, %p55
      %p58 = scmp.ne.s32.totalorder %s41, %s57
      %p59 = scmp.eq.s32.totalorder %s33, 0
      %p60 = por %p58, %p59
      %s62 = sadd.s32 %s61, 1
      %p65 = scmp.eq.s32.totalorder %s27, 1
      %p66 = scmp.ne.s32.totalorder %s61, %s63
      %p67 = scmp.eq.s32.totalorder %s27, 0
      %p68 = por %p66, %p67
      %p69 = scmp.ne.s32.totalorder %s61, %s63
      %p70 = scmp.eq.s32.totalorder %s32, 1
      %p71 = por %p69, %p70
      %p72 = scmp.ne.s32.totalorder %s63, %s64
      %p73 = scmp.eq.s32.totalorder %s32, 0
      %p74 = por %p72, %p73
      %p75 = scmp.ne.s32.totalorder %s63, %s64
      %p76 = scmp.eq.s32.totalorder %s33, 1
      %p77 = por %p75, %p76
      %p79 = scmp.ne.s32.totalorder %s64, %s78
      %p80 = scmp.eq.s32.totalorder %s33, 0
      %p81 = por %p79, %p80
      %s83 = sadd.s32 %s82, 1
      %p86 = scmp.eq.s32.totalorder %s27, 1
      %p87 = scmp.ne.s32.totalorder %s82, %s84
      %p88 = scmp.eq.s32.totalorder %s27, 0
      %p89 = por %p87, %p88
      %p90 = scmp.ne.s32.totalorder %s82, %s84
      %p91 = scmp.eq.s32.totalorder %s32, 1
      %p92 = por %p90, %p91
      %p93 = scmp.ne.s32.totalorder %s84, %s85
      %p94 = scmp.eq.s32.totalorder %s32, 0
      %p95 = por %p93, %p94
      %p96 = scmp.ne.s32.totalorder %s84, %s85
      %p97 = scmp.eq.s32.totalorder %s33, 1
      %p98 = por %p96, %p97
      %p100 = scmp.ne.s32.totalorder %s85, %s99
      %p101 = scmp.eq.s32.totalorder %s33, 0
      %p102 = por %p100, %p101
      %s104 = sadd.s32 %s103, 1
      %p107 = scmp.eq.s32.totalorder %s27, 1
      %p108 = scmp.ne.s32.totalorder %s103, %s105
      %p109 = scmp.eq.s32.totalorder %s27, 0
      %p110 = por %p108, %p109
      %p111 = scmp.ne.s32.totalorder %s103, %s105
      %p112 = scmp.eq.s32.totalorder %s32, 1
      %p113 = por %p111, %p112
      %p114 = scmp.ne.s32.totalorder %s105, %s106
      %p115 = scmp.eq.s32.totalorder %s32, 0
      %p116 = por %p114, %p115
      %p117 = scmp.ne.s32.totalorder %s105, %s106
      %p118 = scmp.eq.s32.totalorder %s33, 1
      %p119 = por %p117, %p118
      %p121 = scmp.ne.s32.totalorder %s106, %s120
      %p122 = scmp.eq.s32.totalorder %s33, 0
      %p123 = por %p121, %p122
      %s125 = sadd.s32 %s124, 1
      %p128 = scmp.eq.s32.totalorder %s27, 1
      %p129 = scmp.ne.s32.totalorder %s124, %s126
      %p130 = scmp.eq.s32.totalorder %s27, 0
      %p131 = por %p129, %p130
      %p132 = scmp.ne.s32.totalorder %s124, %s126
      %p133 = scmp.eq.s32.totalorder %s32, 1
      %p134 = por %p132, %p133
      %p135 = scmp.ne.s32.totalorder %s126, %s127
      %p136 = scmp.eq.s32.totalorder %s32, 0
      %p137 = por %p135, %p136
      %p138 = scmp.ne.s32.totalorder %s126, %s127
      %p139 = scmp.eq.s32.totalorder %s33, 1
      %p140 = por %p138, %p139
      %p142 = scmp.ne.s32.totalorder %s127, %s141
      %p143 = scmp.eq.s32.totalorder %s33, 0
      %p144 = por %p142, %p143
      %s146 = sadd.s32 %s145, 1
      %p149 = scmp.eq.s32.totalorder %s27, 1
      %p150 = scmp.ne.s32.totalorder %s145, %s147
      %p151 = scmp.eq.s32.totalorder %s27, 0
      %p152 = por %p150, %p151
      %p153 = scmp.ne.s32.totalorder %s145, %s147
      %p154 = scmp.eq.s32.totalorder %s32, 1
      %p155 = por %p153, %p154
      %p156 = scmp.ne.s32.totalorder %s147, %s148
      %p157 = scmp.eq.s32.totalorder %s32, 0
      %p158 = por %p156, %p157
      %p159 = scmp.ne.s32.totalorder %s147, %s148
      %p160 = scmp.eq.s32.totalorder %s33, 1
      %p161 = por %p159, %p160
      %p163 = scmp.ne.s32.totalorder %s148, %s162
      %p164 = scmp.eq.s32.totalorder %s33, 0
      %p165 = por %p163, %p164
      %s167 = sadd.s32 %s166, 1
      %p170 = scmp.eq.s32.totalorder %s27, 1
      %p171 = scmp.ne.s32.totalorder %s166, %s168
      %p172 = scmp.eq.s32.totalorder %s27, 0
      %p173 = por %p171, %p172
      %p174 = scmp.ne.s32.totalorder %s166, %s168
      %p175 = scmp.eq.s32.totalorder %s32, 1
      %p176 = por %p174, %p175
      %p177 = scmp.ne.s32.totalorder %s168, %s169
      %p178 = scmp.eq.s32.totalorder %s32, 0
      %p179 = por %p177, %p178
      %p180 = scmp.ne.s32.totalorder %s168, %s169
      %p181 = scmp.eq.s32.totalorder %s33, 1
      %p182 = por %p180, %p181
      %p184 = scmp.ne.s32.totalorder %s169, %s183
      %p185 = scmp.eq.s32.totalorder %s33, 0
      %p186 = por %p184, %p185
      %s188 = sadd.s32 %s187, 1
      %p191 = scmp.eq.s32.totalorder %s27, 1
      %p192 = scmp.ne.s32.totalorder %s187, %s189
      %p193 = scmp.eq.s32.totalorder %s27, 0
      %p194 = por %p192, %p193
      %p195 = scmp.ne.s32.totalorder %s187, %s189
      %p196 = scmp.eq.s32.totalorder %s32, 1
      %p197 = por %p195, %p196
      %p198 = scmp.ne.s32.totalorder %s189, %s190
      %p199 = scmp.eq.s32.totalorder %s32, 0
      %p200 = por %p198, %p199
      %p201 = scmp.ne.s32.totalorder %s189, %s190
      %p202 = scmp.eq.s32.totalorder %s33, 1
      %p203 = por %p201, %p202
      %p205 = scmp.ne.s32.totalorder %s190, %s204
      %p206 = scmp.eq.s32.totalorder %s33, 0
      %p207 = por %p205, %p206
      %s209 = sadd.s32 %s208, 1
      %p212 = scmp.eq.s32.totalorder %s27, 1
      %p213 = scmp.ne.s32.totalorder %s208, %s210
      %p214 = scmp.eq.s32.totalorder %s27, 0
      %p215 = por %p213, %p214
      %p216 = scmp.ne.s32.totalorder %s208, %s210
      %p217 = scmp.eq.s32.totalorder %s32, 1
      %p218 = por %p216, %p217
      %p219 = scmp.ne.s32.totalorder %s210, %s211
      %p220 = scmp.eq.s32.totalorder %s32, 0
      %p221 = por %p219, %p220
      %p222 = scmp.ne.s32.totalorder %s210, %s211
      %p223 = scmp.eq.s32.totalorder %s33, 1
      %p224 = por %p222, %p223
      %p226 = scmp.ne.s32.totalorder %s211, %s225
      %p227 = scmp.eq.s32.totalorder %s33, 0
      %p228 = por %p226, %p227
      %s230 = sadd.s32 %s229, 1
      %p233 = scmp.eq.s32.totalorder %s27, 1
      %p234 = scmp.ne.s32.totalorder %s229, %s231
      %p235 = scmp.eq.s32.totalorder %s27, 0
      %p236 = por %p234, %p235
      %p237 = scmp.ne.s32.totalorder %s229, %s231
      %p238 = scmp.eq.s32.totalorder %s32, 1
      %p239 = por %p237, %p238
      %p240 = scmp.ne.s32.totalorder %s231, %s232
      %p241 = scmp.eq.s32.totalorder %s32, 0
      %p242 = por %p240, %p241
      %p243 = scmp.ne.s32.totalorder %s231, %s232
      %p244 = scmp.eq.s32.totalorder %s33, 1
      %p245 = por %p243, %p244
      %p247 = scmp.ne.s32.totalorder %s232, %s246
      %p248 = scmp.eq.s32.totalorder %s33, 0
      %p249 = por %p247, %p248
      %s251 = sadd.s32 %s250, 1
      %p254 = scmp.eq.s32.totalorder %s27, 1
      %p255 = scmp.ne.s32.totalorder %s250, %s252
      %p256 = scmp.eq.s32.totalorder %s27, 0
      %p257 = por %p255, %p256
      %p258 = scmp.ne.s32.totalorder %s250, %s252
      %p259 = scmp.eq.s32.totalorder %s32, 1
      %p260 = por %p258, %p259
      %p261 = scmp.ne.s32.totalorder %s252, %s253
      %p262 = scmp.eq.s32.totalorder %s32, 0
      %p263 = por %p261, %p262
      %p264 = scmp.ne.s32.totalorder %s252, %s253
      %p265 = scmp.eq.s32.totalorder %s33, 1
      %p266 = por %p264, %p265
      %p268 = scmp.ne.s32.totalorder %s253, %s267
      %p269 = scmp.eq.s32.totalorder %s33, 0
      %p270 = por %p268, %p269
      %s272 = sadd.s32 %s271, 1
      %p275 = scmp.eq.s32.totalorder %s27, 1
      %p276 = scmp.ne.s32.totalorder %s271, %s273
      %p277 = scmp.eq.s32.totalorder %s27, 0
      %p278 = por %p276, %p277
      %p279 = scmp.ne.s32.totalorder %s271, %s273
      %p280 = scmp.eq.s32.totalorder %s32, 1
      %p281 = por %p279, %p280
      %p282 = scmp.ne.s32.totalorder %s273, %s274
      %p283 = scmp.eq.s32.totalorder %s32, 0
      %p284 = por %p282, %p283
      %p285 = scmp.ne.s32.totalorder %s273, %s274
      %p286 = scmp.eq.s32.totalorder %s33, 1
      %p287 = por %p285, %p286
      %p289 = scmp.ne.s32.totalorder %s274, %s288
      %p290 = scmp.eq.s32.totalorder %s33, 0
      %p291 = por %p289, %p290
      %s293 = sadd.s32 %s292, 1
      %p296 = scmp.eq.s32.totalorder %s27, 1
      %p297 = scmp.ne.s32.totalorder %s292, %s294
      %p298 = scmp.eq.s32.totalorder %s27, 0
      %p299 = por %p297, %p298
      %p300 = scmp.ne.s32.totalorder %s292, %s294
      %p301 = scmp.eq.s32.totalorder %s32, 1
      %p302 = por %p300, %p301
      %p303 = scmp.ne.s32.totalorder %s294, %s295
      %p304 = scmp.eq.s32.totalorder %s32, 0
      %p305 = por %p303, %p304
      %p306 = scmp.ne.s32.totalorder %s294, %s295
      %p307 = scmp.eq.s32.totalorder %s33, 1
      %p308 = por %p306, %p307
      %p310 = scmp.ne.s32.totalorder %s295, %s309
      %p311 = scmp.eq.s32.totalorder %s33, 0
      %p312 = por %p310, %p311
      %s314 = sadd.s32 %s313, 1
      %p317 = scmp.eq.s32.totalorder %s27, 1
      %p318 = scmp.ne.s32.totalorder %s313, %s315
      %p319 = scmp.eq.s32.totalorder %s27, 0
      %p320 = por %p318, %p319
      %p321 = scmp.ne.s32.totalorder %s313, %s315
      %p322 = scmp.eq.s32.totalorder %s32, 1
      %p323 = por %p321, %p322
      %p324 = scmp.ne.s32.totalorder %s315, %s316
      %p325 = scmp.eq.s32.totalorder %s32, 0
      %p326 = por %p324, %p325
      %p327 = scmp.ne.s32.totalorder %s315, %s316
      %p328 = scmp.eq.s32.totalorder %s33, 1
      %p329 = por %p327, %p328
      %p331 = scmp.ne.s32.totalorder %s316, %s330
      %p332 = scmp.eq.s32.totalorder %s33, 0
      %p333 = por %p331, %p332
      %s335 = sadd.s32 %s334, 1
      %p338 = scmp.eq.s32.totalorder %s27, 1
      %p339 = scmp.ne.s32.totalorder %s334, %s336
      %p340 = scmp.eq.s32.totalorder %s27, 0
      %p341 = por %p339, %p340
      %p342 = scmp.ne.s32.totalorder %s334, %s336
      %p343 = scmp.eq.s32.totalorder %s32, 1
      %p344 = por %p342, %p343
      %p345 = scmp.ne.s32.totalorder %s336, %s337
      %p346 = scmp.eq.s32.totalorder %s32, 0
      %p347 = por %p345, %p346
      %p348 = scmp.ne.s32.totalorder %s336, %s337
      %p349 = scmp.eq.s32.totalorder %s33, 1
      %p350 = por %p348, %p349
      %p352 = scmp.ne.s32.totalorder %s337, %s351
      %p353 = scmp.eq.s32.totalorder %s33, 0
      %p354 = por %p352, %p353
      %s356 = sadd.s32 %s355, 1
      %p359 = scmp.eq.s32.totalorder %s27, 1
      %p360 = scmp.ne.s32.totalorder %s355, %s357
      %p361 = scmp.eq.s32.totalorder %s27, 0
      %p362 = por %p360, %p361
      %p363 = scmp.ne.s32.totalorder %s355, %s357
      %p364 = scmp.eq.s32.totalorder %s32, 1
      %p365 = por %p363, %p364
      %p366 = scmp.ne.s32.totalorder %s357, %s358
      %p367 = scmp.eq.s32.totalorder %s32, 0
      %p368 = por %p366, %p367
      %p369 = scmp.ne.s32.totalorder %s357, %s358
      %p370 = scmp.eq.s32.totalorder %s33, 1
      %p371 = por %p369, %p370
      %p373 = scmp.ne.s32.totalorder %s358, %s372
      %p374 = scmp.eq.s32.totalorder %s33, 0
      %p375 = por %p373, %p374
      %s376 = ssub.s32 %s27, %s34
      %p377 = scmp.eq.s32.totalorder %s376, 0
      %s379 = sadd.s32 %s378, 1
      %s380 = scalar_select %p377, %s378, %s379
      %p383 = pneg %p377
      %p384 = scmp.eq.s32.totalorder %s27, 1
      %p385 = por %p383, %p384
      %p386 = scmp.ne.s32.totalorder %s378, %s381
      %p387 = scmp.eq.s32.totalorder %s27, 0
      %p388 = por %p386, %p387
      %p389 = scmp.ne.s32.totalorder %s378, %s381
      %p390 = scmp.eq.s32.totalorder %s32, 1
      %p391 = por %p389, %p390
      %p392 = scmp.ne.s32.totalorder %s381, %s382
      %p393 = scmp.eq.s32.totalorder %s32, 0
      %p394 = por %p392, %p393
      %p395 = scmp.ne.s32.totalorder %s381, %s382
      %p396 = scmp.eq.s32.totalorder %s33, 1
      %p397 = por %p395, %p396
      %p399 = scmp.ne.s32.totalorder %s382, %s398
      %p400 = scmp.eq.s32.totalorder %s33, 0
      %p401 = por %p399, %p400
      %p402 = scmp.le.s32.totalorder 1, %s27
      %p403 = scmp.lt.s32.totalorder %s27, 3
      %p404 = pnand %p402, %p403
      %p405 = pneg %p404
      // Predicated region
      $region9: #{tpu_custom_call.1} parent=5 // pred_check
        _
      $region10: #{tpu_custom_call.1} parent=5 // pred_check_branch
        %407 = sbr.rel (%p404) target = $region12
      $region11: #{tpu_custom_call.1} parent=5 // pred_region
        %s408 = ssub.s32 %s27, 1
        // Predicated region
        $region13: #{tpu_custom_call.1} parent=11 // pred_check
          %p409 = pneg %p74
        $region14: #{tpu_custom_call.1} parent=11 // pred_check_branch
          %411 = sbr.rel (%p409) target = $region16
        $region15: #{tpu_custom_call.1} parent=11 // pred_region
          _
        $region16: #{tpu_custom_call.1} parent=11 // pred_fallthru
          _
        // Predicated region
        $region17: #{tpu_custom_call.1} parent=11 // pred_check
          %p412 = pneg %p95
        $region18: #{tpu_custom_call.1} parent=11 // pred_check_branch
          %414 = sbr.rel (%p412) target = $region20
        $region19: #{tpu_custom_call.1} parent=11 // pred_region
          _
        $region20: #{tpu_custom_call.1} parent=11 // pred_fallthru
          _
        // Predicated region
        $region21: #{tpu_custom_call.1} parent=11 // pred_check
          %p415 = pneg %p116
        $region22: #{tpu_custom_call.1} parent=11 // pred_check_branch
          %417 = sbr.rel (%p415) target = $region24
        $region23: #{tpu_custom_call.1} parent=11 // pred_region
          _
        $region24: #{tpu_custom_call.1} parent=11 // pred_fallthru
          _
        // Predicated region
        $region25: #{tpu_custom_call.1} parent=11 // pred_check
          %p418 = pneg %p137
        $region26: #{tpu_custom_call.1} parent=11 // pred_check_branch
          %420 = sbr.rel (%p418) target = $region28
        $region27: #{tpu_custom_call.1} parent=11 // pred_region
          _
        $region28: #{tpu_custom_call.1} parent=11 // pred_fallthru
          _
        // Predicated region
        $region29: #{tpu_custom_call.1} parent=11 // pred_check
          %p421 = pneg %p158
        $region30: #{tpu_custom_call.1} parent=11 // pred_check_branch
          %423 = sbr.rel (%p421) target = $region32
        $region31: #{tpu_custom_call.1} parent=11 // pred_region
          _
        $region32: #{tpu_custom_call.1} parent=11 // pred_fallthru
          _
        // Predicated region
        $region33: #{tpu_custom_call.1} parent=11 // pred_check
          %p424 = pneg %p179
        $region34: #{tpu_custom_call.1} parent=11 // pred_check_branch
          %426 = sbr.rel (%p424) target = $region36
        $region35: #{tpu_custom_call.1} parent=11 // pred_region
          _
        $region36: #{tpu_custom_call.1} parent=11 // pred_fallthru
          _
        // Predicated region
        $region37: #{tpu_custom_call.1} parent=11 // pred_check
          %p427 = pneg %p200
        $region38: #{tpu_custom_call.1} parent=11 // pred_check_branch
          %429 = sbr.rel (%p427) target = $region40
        $region39: #{tpu_custom_call.1} parent=11 // pred_region
          _
        $region40: #{tpu_custom_call.1} parent=11 // pred_fallthru
          _
        // Predicated region
        $region41: #{tpu_custom_call.1} parent=11 // pred_check
          %p430 = pneg %p221
        $region42: #{tpu_custom_call.1} parent=11 // pred_check_branch
          %432 = sbr.rel (%p430) target = $region44
        $region43: #{tpu_custom_call.1} parent=11 // pred_region
          _
        $region44: #{tpu_custom_call.1} parent=11 // pred_fallthru
          _
        // Predicated region
        $region45: #{tpu_custom_call.1} parent=11 // pred_check
          %p433 = pneg %p242
        $region46: #{tpu_custom_call.1} parent=11 // pred_check_branch
          %435 = sbr.rel (%p433) target = $region48
        $region47: #{tpu_custom_call.1} parent=11 // pred_region
          _
        $region48: #{tpu_custom_call.1} parent=11 // pred_fallthru
          _
        // Predicated region
        $region49: #{tpu_custom_call.1} parent=11 // pred_check
          %p436 = pneg %p263
        $region50: #{tpu_custom_call.1} parent=11 // pred_check_branch
          %438 = sbr.rel (%p436) target = $region52
        $region51: #{tpu_custom_call.1} parent=11 // pred_region
          _
        $region52: #{tpu_custom_call.1} parent=11 // pred_fallthru
          _
        // Predicated region
        $region53: #{tpu_custom_call.1} parent=11 // pred_check
          %p439 = pneg %p284
        $region54: #{tpu_custom_call.1} parent=11 // pred_check_branch
          %441 = sbr.rel (%p439) target = $region56
        $region55: #{tpu_custom_call.1} parent=11 // pred_region
          _
        $region56: #{tpu_custom_call.1} parent=11 // pred_fallthru
          _
        // Predicated region
        $region57: #{tpu_custom_call.1} parent=11 // pred_check
          %p442 = pneg %p305
        $region58: #{tpu_custom_call.1} parent=11 // pred_check_branch
          %444 = sbr.rel (%p442) target = $region60
        $region59: #{tpu_custom_call.1} parent=11 // pred_region
          _
        $region60: #{tpu_custom_call.1} parent=11 // pred_fallthru
          _
        // Predicated region
        $region61: #{tpu_custom_call.1} parent=11 // pred_check
          %p445 = pneg %p326
        $region62: #{tpu_custom_call.1} parent=11 // pred_check_branch
          %447 = sbr.rel (%p445) target = $region64
        $region63: #{tpu_custom_call.1} parent=11 // pred_region
          _
        $region64: #{tpu_custom_call.1} parent=11 // pred_fallthru
          _
        // Predicated region
        $region65: #{tpu_custom_call.1} parent=11 // pred_check
          %p448 = pneg %p347
        $region66: #{tpu_custom_call.1} parent=11 // pred_check_branch
          %450 = sbr.rel (%p448) target = $region68
        $region67: #{tpu_custom_call.1} parent=11 // pred_region
          _
        $region68: #{tpu_custom_call.1} parent=11 // pred_fallthru
          _
        // Predicated region
        $region69: #{tpu_custom_call.1} parent=11 // pred_check
          %p451 = pneg %p368
        $region70: #{tpu_custom_call.1} parent=11 // pred_check_branch
          %453 = sbr.rel (%p451) target = $region72
        $region71: #{tpu_custom_call.1} parent=11 // pred_region
          _
        $region72: #{tpu_custom_call.1} parent=11 // pred_fallthru
          _
      $region12: #{tpu_custom_call.1} parent=5 // pred_fallthru
        _
      %p454 = scmp.lt.s32.totalorder %s27, 2
      // Predicated region
      $region73: #{tpu_custom_call.1} parent=5 // pred_check
        %p455 = pneg %p454
      $region74: #{tpu_custom_call.1} parent=5 // pred_check_branch
        %457 = sbr.rel (%p455) target = $region76
      $region75: #{tpu_custom_call.1} parent=5 // pred_region
        // Predicated region
        $region77: #{tpu_custom_call.1} parent=75 // pred_check
          %p458 = pneg %p47
        $region78: #{tpu_custom_call.1} parent=75 // pred_check_branch
          %460 = sbr.rel (%p458) target = $region80
        $region79: #{tpu_custom_call.1} parent=75 // pred_region
          %s461 = sand.u32 %s37, 1
          %s462 = sand.u32 %s37, 1
          %s463 = smul.addr %s462, 16
          %s464 = scalar_lea.vmem [#allocation3], %s463
          %s465 = smul.addr %s27, 8
          %s466 = scalar_lea.vmem %s0, %s465
          // Predicated region
          $region81: #{tpu_custom_call.1} parent=79 // pred_check
            _
          $region82: #{tpu_custom_call.1} parent=79 // pred_check_branch
            %468 = sbr.rel (0) target = $region84
          $region83: #{tpu_custom_call.1} parent=79 // pred_region
            // Predicated region
            $region85: #{tpu_custom_call.1} parent=83 // pred_check
              _
            $region86: #{tpu_custom_call.1} parent=83 // pred_check_branch
              %470 = sbr.rel (0) target = $region88
            $region87: #{tpu_custom_call.1} parent=83 // pred_region
              // Predicated region
              $region100: #{tpu_custom_call.1} parent=87 // pred_check
                _
              $region101: #{tpu_custom_call.1} parent=87 // pred_check_branch
                %487 = sbr.rel (0) target = $region103
              $region102: #{tpu_custom_call.1} parent=87 // pred_region
                loop: start=0, step=1, limit=1
                $region104: #{tpu_custom_call.1} parent=102 // loop_pre_header
                  _
                $region105: #{tpu_custom_call.1} parent=102 // loop_header
                  %s489 = sphi 0, %s493
                  %p490 = scmp.ge.s32.totalorder %s489, 1
                  %s494 = sphi %s466, %s466
                  %s495 = sphi %s464, %s464
                $region106: #{tpu_custom_call.1} parent=102 // loop_header_branch
                  %492 = sbr.rel (%p490) target = $region110
                $region107: #{tpu_custom_call.1} parent=102 // loop_body
                  %v496 = vld [vmem:[%s494] sm:$0xff]
                  %497 = vst [vmem:[%s495] sm:$0xff] %v496
                  %v498 = vld [vmem:[%s494 + $0x10] sm:$0xff]
                  %499 = vst [vmem:[%s495 + $0x8] sm:$0xff] %v498
                $region108: #{tpu_custom_call.1} parent=102 // loop_footer
                  %s493 = sadd.s32 1, %s489
                $region109: #{tpu_custom_call.1} parent=102 // loop_footer_branch
                  %488 = sbr.rel target = $region105
                $region110: #{tpu_custom_call.1} parent=102 // loop_exit
                  _
              $region103: #{tpu_custom_call.1} parent=87 // pred_fallthru
                _
              // Predicated region
              $region111: #{tpu_custom_call.1} parent=87 // pred_check
                _
              $region112: #{tpu_custom_call.1} parent=87 // pred_check_branch
                %501 = sbr.rel target = $region114
              $region113: #{tpu_custom_call.1} parent=87 // pred_region
                _
              $region114: #{tpu_custom_call.1} parent=87 // pred_fallthru
                _
            $region88: #{tpu_custom_call.1} parent=83 // pred_fallthru
              _
            // Predicated region
            $region89: #{tpu_custom_call.1} parent=83 // pred_check
              _
            $region90: #{tpu_custom_call.1} parent=83 // pred_check_branch
              %472 = sbr.rel target = $region92
            $region91: #{tpu_custom_call.1} parent=83 // pred_region
              loop: start=0, step=1, limit=1
              $region93: #{tpu_custom_call.1} parent=91 // loop_pre_header
                _
              $region94: #{tpu_custom_call.1} parent=91 // loop_header
                %s475 = sphi 0, %s479
                %p476 = scmp.ge.s32.totalorder %s475, 1
                %s480 = sphi %s466, %s466
                %s481 = sphi %s464, %s464
              $region95: #{tpu_custom_call.1} parent=91 // loop_header_branch
                %478 = sbr.rel (%p476) target = $region99
              $region96: #{tpu_custom_call.1} parent=91 // loop_body
                %v482 = vld [vmem:[%s480] sm:$0xff]
                %483 = vst [vmem:[%s481] sm:$0xff] %v482
                %v484 = vld [vmem:[%s480 + $0x10] sm:$0xff]
                %485 = vst [vmem:[%s481 + $0x8] sm:$0xff] %v484
              $region97: #{tpu_custom_call.1} parent=91 // loop_footer
                %s479 = sadd.s32 1, %s475
              $region98: #{tpu_custom_call.1} parent=91 // loop_footer_branch
                %474 = sbr.rel target = $region94
              $region99: #{tpu_custom_call.1} parent=91 // loop_exit
                _
            $region92: #{tpu_custom_call.1} parent=83 // pred_fallthru
              _
          $region84: #{tpu_custom_call.1} parent=79 // pred_fallthru
            _
          %502 = vnop
        $region80: #{tpu_custom_call.1} parent=75 // pred_fallthru
          _
      $region76: #{tpu_custom_call.1} parent=5 // pred_fallthru
        _
      %p503 = scmp.le.s32.totalorder 1, %s27
      %p504 = scmp.lt.s32.totalorder %s27, 3
      %p505 = pnand %p503, %p504
      %p506 = pneg %p505
      // Predicated region
      $region115: #{tpu_custom_call.1} parent=5 // pred_check
        _
      $region116: #{tpu_custom_call.1} parent=5 // pred_check_branch
        %508 = sbr.rel (%p505) target = $region118
      $region117: #{tpu_custom_call.1} parent=5 // pred_region
        %s509 = ssub.s32 %s27, 1
        %s510 = sand.u32 %s40, 1
        %s511 = sand.u32 %s40, 1
        %s512 = smul.addr %s511, 16
        %s513 = scalar_lea.vmem [#allocation3], %s512
        // Predicated region
        $region119: #{tpu_custom_call.1} parent=117 // pred_check
          %p514 = pneg %p53
        $region120: #{tpu_custom_call.1} parent=117 // pred_check_branch
          %516 = sbr.rel (%p514) target = $region122
        $region121: #{tpu_custom_call.1} parent=117 // pred_region
          _
        $region122: #{tpu_custom_call.1} parent=117 // pred_fallthru
          _
        %s517 = sand.u32 %s40, 1
        %s518 = sand.u32 %s40, 1
        %s519 = smul.addr %s518, 16
        %s520 = scalar_lea.vmem [#allocation3], %s519
        %p521 = pneg %p53
        %p522 = pneg %p50
        %p523 = pneg %p74
        %p524 = pneg %p71
        %p525 = pneg %p95
        %p526 = pneg %p92
        %p527 = pneg %p116
        %p528 = pneg %p113
        %p529 = pneg %p137
        %p530 = pneg %p134
        %p531 = pneg %p158
        %p532 = pneg %p155
        %p533 = pneg %p179
        %p534 = pneg %p176
        %p535 = pneg %p200
        %p536 = pneg %p197
        %p537 = pneg %p221
        %p538 = pneg %p218
        %p539 = pneg %p242
        %p540 = pneg %p239
        %p541 = pneg %p263
        %p542 = pneg %p260
        %p543 = pneg %p284
        %p544 = pneg %p281
        %p545 = pneg %p305
        %p546 = pneg %p302
        %p547 = pneg %p326
        %p548 = pneg %p323
        %p549 = pneg %p347
        %p550 = pneg %p344
        %p551 = pneg %p368
        %p552 = pneg %p365
        %p553 = pneg %p394
        %p554 = pneg %p391
        %s555 = sand.u32 %s381, 1
        %s556 = scalar_lea.sflag [#allocation5], %s555
        %s557 = sand.u32 %s381, 1
        %s558 = scalar_lea.vmem [#allocation4], %s557
        %v560 = vld [vmem:[%s513] sm:$0xff]
        %v561 = vld [vmem:[%s513 + $0x8] sm:$0xff]
        %v562 = vand.u32 2147483647, %v560
        %vm563 = vcmp.le.f32.partialorder %v562, 0.7853982
        %vm564 = vcmp.lt.s32.totalorder %v560, 0
        %v565 = vand.u32 %v560, 2139095040
        %v566 = vshrl.u32 %v565, 23
        %v567 = vsub.s32 %v566, 127
        %v568 = vand.u32 2147483647, %v560
        %v569 = vand.u32 %v568, 8388607
        %v570 = vor.u32 %v569, 8388608
        %v571 = vsub.s32 0, %v570
        %v572 = vadd.s32 %v567, 1
        %vm573 = vcmp.gt.s32.totalorder %v572, 0
        %v574 = vsel %vm573, %v572, 0
        %v575 = vshrl.u32 %v574, 5
        %v576 = vand.u32 %v574, 31
        %v577 = vsub.s32 32, %v576
        %v578 = vshrl.u32 683565275, %v577
        %v579 = vshll.u32 683565275, %v576
        %v580 = vshrl.u32 2475754826, %v577
        %v581 = vor.u32 %v579, %v580
        %v582 = vshll.u32 2475754826, %v576
        %v583 = vshrl.u32 2131351028, %v577
        %v584 = vor.u32 %v582, %v583
        %v585 = vshll.u32 2131351028, %v576
        %v586 = vshrl.u32 2102212464, %v577
        %v587 = vor.u32 %v585, %v586
        %v588 = vshll.u32 2102212464, %v576
        %v589 = vshrl.u32 920167782, %v577
        %v590 = vor.u32 %v588, %v589
        %v591 = vshll.u32 920167782, %v576
        %v592 = vshrl.u32 1326507024, %v577
        %v593 = vor.u32 %v591, %v592
        %vm594 = vcmp.lt.s32.totalorder %v575, 1
        %vm595 = vcmp.lt.s32.totalorder %v575, 2
        %vm596 = vcmp.lt.s32.totalorder %v575, 3
        %vm597 = vcmp.lt.s32.totalorder %v575, 4
        %v598 = vsel %vm594, %v578, %v581
        %v599 = vsel %vm597, %v587, 2102212464
        %v600 = vsel %vm596, %v584, %v599
        %v601 = vsel %vm595, %v598, %v600
        %v602 = vsel %vm594, %v581, %v584
        %v603 = vsel %vm597, %v590, 920167782
        %v604 = vsel %vm596, %v587, %v603
        %v605 = vsel %vm595, %v602, %v604
        %v606 = vsel %vm594, %v584, %v587
        %v607 = vsel %vm597, %v593, 1326507024
        %v608 = vsel %vm596, %v590, %v607
        %v609 = vsel %vm595, %v606, %v608
        %v610 = vshll.u32 %v570, 8
        %v611 = vmul.u32.u64.compose %v610, %v609
        %v612 = vextract.low.u32 %v611
        %v613 = vextract.high.u32 %v611
        %v614 = vmul.u32.u64.compose %v610, %v605
        %v615 = vextract.low.u32 %v614
        %v616 = vextract.high.u32 %v614
        %v617 = vmul.u32 %v610, %v601
        %v618 = vadd.s32 %v613, %v615
        %vm619 = vc.u32 %v613, %v615
        %v620 = vadd.s32 %v616, 1
        %v621 = vsel %vm619, %v620, %v616
        %v622 = vadd.s32 %v617, %v621
        %v623 = vadd.s32 %v622, 536870912
        %v624 = vshrl.u32 %v623, 30
        %v625 = vshll.u32 %v624, 30
        %v626 = vsub.s32 %v622, %v625
        %vm627 = vcmp.lt.s32.totalorder %v626, 0
        %v628 = vsub.s32 0, %v626
        %v629 = vsel %vm627, %v628, %v626
        %v630 = vclz %v629
        %v631 = vsub.s32 %v630, 2
        %vm632 = vcmp.gt.s32.totalorder 0, %v631
        %v633 = vsel %vm632, 0, %v631
        %v634 = vsub.s32 32, %v633
        %v635 = vshll.u32 %v626, %v633
        %v636 = vshrl.u32 %v618, %v634
        %v637 = vor.u32 %v635, %v636
        %v638 = vsub.s32 4294967266, %v633
        %v639 = vadd.s32 %v638, 127
        %v640 = vshll.u32 %v639, 23
        %v641 = vor.u32 4788187, %v640
        %v642 = vand.u32 2147483647, %v641
        %v644 = vcvt.s32.f32 %v637
        %v645 = vmul.f32 %v644, %v642
        %v646 = vxor.u32 %v645, 2147483648
        %v647 = vsel %vm564, %v646, %v645
        %v648 = vsub.s32 4, %v624
        %v649 = vsel %vm564, %v648, %v624
        %v650 = vsel %vm563, %v560, %v647
        %v651 = vsel %vm563, 0, %v649
        %v652 = vcosq.f32.pop %v650
        %v653 = vsinq.f32.pop %v650
        %vm654 = vweird.f32 %v560
        %v655 = vadd.s32 %v651, 3
        %v656 = vand.u32 %v655, 3
        %vm657 = vcmp.lt.s32.totalorder %v656, 2
        %vm658 = vcmp.eq.s32.totalorder %v656, 0
        %v659 = vxor.u32 %v653, 2147483648
        %v660 = vsel %vm658, %v652, %v659
        %vm661 = vcmp.eq.s32.totalorder %v656, 2
        %v662 = vxor.u32 %v652, 2147483648
        %v663 = vsel %vm661, %v662, %v653
        %v664 = vsel %vm657, %v660, %v663
        %v665 = vsel %vm654, nan, %v664
        %v666 = vand.u32 2147483647, %v561
        %vm667 = vcmp.le.f32.partialorder %v666, 0.7853982
        %vm668 = vcmp.lt.s32.totalorder %v561, 0
        %v669 = vand.u32 %v561, 2139095040
        %v670 = vshrl.u32 %v669, 23
        %v671 = vsub.s32 %v670, 127
        %v672 = vand.u32 2147483647, %v561
        %v673 = vand.u32 %v672, 8388607
        %v674 = vor.u32 %v673, 8388608
        %v675 = vsub.s32 0, %v674
        %v676 = vadd.s32 %v671, 1
        %vm677 = vcmp.gt.s32.totalorder %v676, 0
        %v678 = vsel %vm677, %v676, 0
        %v679 = vshrl.u32 %v678, 5
        %v680 = vand.u32 %v678, 31
        %v681 = vsub.s32 32, %v680
        %v682 = vshrl.u32 683565275, %v681
        %v683 = vshll.u32 683565275, %v680
        %v684 = vshrl.u32 2475754826, %v681
        %v685 = vor.u32 %v683, %v684
        %v686 = vshll.u32 2475754826, %v680
        %v687 = vshrl.u32 2131351028, %v681
        %v688 = vor.u32 %v686, %v687
        %v689 = vshll.u32 2131351028, %v680
        %v690 = vshrl.u32 2102212464, %v681
        %v691 = vor.u32 %v689, %v690
        %v692 = vshll.u32 2102212464, %v680
        %v693 = vshrl.u32 920167782, %v681
        %v694 = vor.u32 %v692, %v693
        %v695 = vshll.u32 920167782, %v680
        %v696 = vshrl.u32 1326507024, %v681
        %v697 = vor.u32 %v695, %v696
        %vm698 = vcmp.lt.s32.totalorder %v679, 1
        %vm699 = vcmp.lt.s32.totalorder %v679, 2
        %vm700 = vcmp.lt.s32.totalorder %v679, 3
        %vm701 = vcmp.lt.s32.totalorder %v679, 4
        %v702 = vsel %vm698, %v682, %v685
        %v703 = vsel %vm701, %v691, 2102212464
        %v704 = vsel %vm700, %v688, %v703
        %v705 = vsel %vm699, %v702, %v704
        %v706 = vsel %vm698, %v685, %v688
        %v707 = vsel %vm701, %v694, 920167782
        %v708 = vsel %vm700, %v691, %v707
        %v709 = vsel %vm699, %v706, %v708
        %v710 = vsel %vm698, %v688, %v691
        %v711 = vsel %vm701, %v697, 1326507024
        %v712 = vsel %vm700, %v694, %v711
        %v713 = vsel %vm699, %v710, %v712
        %v714 = vshll.u32 %v674, 8
        %v715 = vmul.u32.u64.compose %v714, %v713
        %v716 = vextract.low.u32 %v715
        %v717 = vextract.high.u32 %v715
        %v718 = vmul.u32.u64.compose %v714, %v709
        %v719 = vextract.low.u32 %v718
        %v720 = vextract.high.u32 %v718
        %v721 = vmul.u32 %v714, %v705
        %v722 = vadd.s32 %v717, %v719
        %vm723 = vc.u32 %v717, %v719
        %v724 = vadd.s32 %v720, 1
        %v725 = vsel %vm723, %v724, %v720
        %v726 = vadd.s32 %v721, %v725
        %v727 = vadd.s32 %v726, 536870912
        %v728 = vshrl.u32 %v727, 30
        %v729 = vshll.u32 %v728, 30
        %v730 = vsub.s32 %v726, %v729
        %vm731 = vcmp.lt.s32.totalorder %v730, 0
        %v732 = vsub.s32 0, %v730
        %v733 = vsel %vm731, %v732, %v730
        %v734 = vclz %v733
        %v735 = vsub.s32 %v734, 2
        %vm736 = vcmp.gt.s32.totalorder 0, %v735
        %v737 = vsel %vm736, 0, %v735
        %v738 = vsub.s32 32, %v737
        %v739 = vshll.u32 %v730, %v737
        %v740 = vshrl.u32 %v722, %v738
        %v741 = vor.u32 %v739, %v740
        %v742 = vsub.s32 4294967266, %v737
        %v743 = vadd.s32 %v742, 127
        %v744 = vshll.u32 %v743, 23
        %v745 = vor.u32 4788187, %v744
        %v746 = vand.u32 2147483647, %v745
        %v748 = vcvt.s32.f32 %v741
        %v749 = vmul.f32 %v748, %v746
        %v750 = vxor.u32 %v749, 2147483648
        %v751 = vsel %vm668, %v750, %v749
        %v752 = vsub.s32 4, %v728
        %v753 = vsel %vm668, %v752, %v728
        %v754 = vsel %vm667, %v561, %v751
        %v755 = vsel %vm667, 0, %v753
        %v756 = vcosq.f32.pop %v754
        %v757 = vsinq.f32.pop %v754
        %vm758 = vweird.f32 %v561
        %v759 = vadd.s32 %v755, 3
        %v760 = vand.u32 %v759, 3
        %vm761 = vcmp.lt.s32.totalorder %v760, 2
        %vm762 = vcmp.eq.s32.totalorder %v760, 0
        %v763 = vxor.u32 %v757, 2147483648
        %v764 = vsel %vm762, %v756, %v763
        %vm765 = vcmp.eq.s32.totalorder %v760, 2
        %v766 = vxor.u32 %v756, 2147483648
        %v767 = vsel %vm765, %v766, %v757
        %v768 = vsel %vm761, %v764, %v767
        %v769 = vsel %vm758, nan, %v768
        %v770 = vand.u32 2147483647, %v560
        %vm771 = vcmp.le.f32.partialorder %v770, 0.7853982
        %vm772 = vcmp.lt.s32.totalorder %v560, 0
        %v773 = vand.u32 %v560, 2139095040
        %v774 = vshrl.u32 %v773, 23
        %v775 = vsub.s32 %v774, 127
        %v776 = vand.u32 2147483647, %v560
        %v777 = vand.u32 %v776, 8388607
        %v778 = vor.u32 %v777, 8388608
        %v779 = vsub.s32 0, %v778
        %v780 = vadd.s32 %v775, 1
        %vm781 = vcmp.gt.s32.totalorder %v780, 0
        %v782 = vsel %vm781, %v780, 0
        %v783 = vshrl.u32 %v782, 5
        %v784 = vand.u32 %v782, 31
        %v785 = vsub.s32 32, %v784
        %v786 = vshrl.u32 683565275, %v785
        %v787 = vshll.u32 683565275, %v784
        %v788 = vshrl.u32 2475754826, %v785
        %v789 = vor.u32 %v787, %v788
        %v790 = vshll.u32 2475754826, %v784
        %v791 = vshrl.u32 2131351028, %v785
        %v792 = vor.u32 %v790, %v791
        %v793 = vshll.u32 2131351028, %v784
        %v794 = vshrl.u32 2102212464, %v785
        %v795 = vor.u32 %v793, %v794
        %v796 = vshll.u32 2102212464, %v784
        %v797 = vshrl.u32 920167782, %v785
        %v798 = vor.u32 %v796, %v797
        %v799 = vshll.u32 920167782, %v784
        %v800 = vshrl.u32 1326507024, %v785
        %v801 = vor.u32 %v799, %v800
        %vm802 = vcmp.lt.s32.totalorder %v783, 1
        %vm803 = vcmp.lt.s32.totalorder %v783, 2
        %vm804 = vcmp.lt.s32.totalorder %v783, 3
        %vm805 = vcmp.lt.s32.totalorder %v783, 4
        %v806 = vsel %vm802, %v786, %v789
        %v807 = vsel %vm805, %v795, 2102212464
        %v808 = vsel %vm804, %v792, %v807
        %v809 = vsel %vm803, %v806, %v808
        %v810 = vsel %vm802, %v789, %v792
        %v811 = vsel %vm805, %v798, 920167782
        %v812 = vsel %vm804, %v795, %v811
        %v813 = vsel %vm803, %v810, %v812
        %v814 = vsel %vm802, %v792, %v795
        %v815 = vsel %vm805, %v801, 1326507024
        %v816 = vsel %vm804, %v798, %v815
        %v817 = vsel %vm803, %v814, %v816
        %v818 = vshll.u32 %v778, 8
        %v819 = vmul.u32.u64.compose %v818, %v817
        %v820 = vextract.low.u32 %v819
        %v821 = vextract.high.u32 %v819
        %v822 = vmul.u32.u64.compose %v818, %v813
        %v823 = vextract.low.u32 %v822
        %v824 = vextract.high.u32 %v822
        %v825 = vmul.u32 %v818, %v809
        %v826 = vadd.s32 %v821, %v823
        %vm827 = vc.u32 %v821, %v823
        %v828 = vadd.s32 %v824, 1
        %v829 = vsel %vm827, %v828, %v824
        %v830 = vadd.s32 %v825, %v829
        %v831 = vadd.s32 %v830, 536870912
        %v832 = vshrl.u32 %v831, 30
        %v833 = vshll.u32 %v832, 30
        %v834 = vsub.s32 %v830, %v833
        %vm835 = vcmp.lt.s32.totalorder %v834, 0
        %v836 = vsub.s32 0, %v834
        %v837 = vsel %vm835, %v836, %v834
        %v838 = vclz %v837
        %v839 = vsub.s32 %v838, 2
        %vm840 = vcmp.gt.s32.totalorder 0, %v839
        %v841 = vsel %vm840, 0, %v839
        %v842 = vsub.s32 32, %v841
        %v843 = vshll.u32 %v834, %v841
        %v844 = vshrl.u32 %v826, %v842
        %v845 = vor.u32 %v843, %v844
        %v846 = vsub.s32 4294967266, %v841
        %v847 = vadd.s32 %v846, 127
        %v848 = vshll.u32 %v847, 23
        %v849 = vor.u32 4788187, %v848
        %v850 = vand.u32 2147483647, %v849
        %v852 = vcvt.s32.f32 %v845
        %v853 = vmul.f32 %v852, %v850
        %v854 = vxor.u32 %v853, 2147483648
        %v855 = vsel %vm772, %v854, %v853
        %v856 = vsub.s32 4, %v832
        %v857 = vsel %vm772, %v856, %v832
        %v858 = vsel %vm771, %v560, %v855
        %v859 = vsel %vm771, 0, %v857
        %v860 = vcosq.f32.pop %v858
        %v861 = vsinq.f32.pop %v858
        %vm862 = vweird.f32 %v560
        %v863 = vand.u32 %v859, 3
        %vm864 = vcmp.lt.s32.totalorder %v863, 2
        %vm865 = vcmp.eq.s32.totalorder %v863, 0
        %v866 = vxor.u32 %v861, 2147483648
        %v867 = vsel %vm865, %v860, %v866
        %vm868 = vcmp.eq.s32.totalorder %v863, 2
        %v869 = vxor.u32 %v860, 2147483648
        %v870 = vsel %vm868, %v869, %v861
        %v871 = vsel %vm864, %v867, %v870
        %v872 = vsel %vm862, nan, %v871
        %v873 = vand.u32 2147483647, %v561
        %vm874 = vcmp.le.f32.partialorder %v873, 0.7853982
        %vm875 = vcmp.lt.s32.totalorder %v561, 0
        %v876 = vand.u32 %v561, 2139095040
        %v877 = vshrl.u32 %v876, 23
        %v878 = vsub.s32 %v877, 127
        %v879 = vand.u32 2147483647, %v561
        %v880 = vand.u32 %v879, 8388607
        %v881 = vor.u32 %v880, 8388608
        %v882 = vsub.s32 0, %v881
        %v883 = vadd.s32 %v878, 1
        %vm884 = vcmp.gt.s32.totalorder %v883, 0
        %v885 = vsel %vm884, %v883, 0
        %v886 = vshrl.u32 %v885, 5
        %v887 = vand.u32 %v885, 31
        %v888 = vsub.s32 32, %v887
        %v889 = vshrl.u32 683565275, %v888
        %v890 = vshll.u32 683565275, %v887
        %v891 = vshrl.u32 2475754826, %v888
        %v892 = vor.u32 %v890, %v891
        %v893 = vshll.u32 2475754826, %v887
        %v894 = vshrl.u32 2131351028, %v888
        %v895 = vor.u32 %v893, %v894
        %v896 = vshll.u32 2131351028, %v887
        %v897 = vshrl.u32 2102212464, %v888
        %v898 = vor.u32 %v896, %v897
        %v899 = vshll.u32 2102212464, %v887
        %v900 = vshrl.u32 920167782, %v888
        %v901 = vor.u32 %v899, %v900
        %v902 = vshll.u32 920167782, %v887
        %v903 = vshrl.u32 1326507024, %v888
        %v904 = vor.u32 %v902, %v903
        %vm905 = vcmp.lt.s32.totalorder %v886, 1
        %vm906 = vcmp.lt.s32.totalorder %v886, 2
        %vm907 = vcmp.lt.s32.totalorder %v886, 3
        %vm908 = vcmp.lt.s32.totalorder %v886, 4
        %v909 = vsel %vm905, %v889, %v892
        %v910 = vsel %vm908, %v898, 2102212464
        %v911 = vsel %vm907, %v895, %v910
        %v912 = vsel %vm906, %v909, %v911
        %v913 = vsel %vm905, %v892, %v895
        %v914 = vsel %vm908, %v901, 920167782
        %v915 = vsel %vm907, %v898, %v914
        %v916 = vsel %vm906, %v913, %v915
        %v917 = vsel %vm905, %v895, %v898
        %v918 = vsel %vm908, %v904, 1326507024
        %v919 = vsel %vm907, %v901, %v918
        %v920 = vsel %vm906, %v917, %v919
        %v921 = vshll.u32 %v881, 8
        %v922 = vmul.u32.u64.compose %v921, %v920
        %v923 = vextract.low.u32 %v922
        %v924 = vextract.high.u32 %v922
        %v925 = vmul.u32.u64.compose %v921, %v916
        %v926 = vextract.low.u32 %v925
        %v927 = vextract.high.u32 %v925
        %v928 = vmul.u32 %v921, %v912
        %v929 = vadd.s32 %v924, %v926
        %vm930 = vc.u32 %v924, %v926
        %v931 = vadd.s32 %v927, 1
        %v932 = vsel %vm930, %v931, %v927
        %v933 = vadd.s32 %v928, %v932
        %v934 = vadd.s32 %v933, 536870912
        %v935 = vshrl.u32 %v934, 30
        %v936 = vshll.u32 %v935, 30
        %v937 = vsub.s32 %v933, %v936
        %vm938 = vcmp.lt.s32.totalorder %v937, 0
        %v939 = vsub.s32 0, %v937
        %v940 = vsel %vm938, %v939, %v937
        %v941 = vclz %v940
        %v942 = vsub.s32 %v941, 2
        %vm943 = vcmp.gt.s32.totalorder 0, %v942
        %v944 = vsel %vm943, 0, %v942
        %v945 = vsub.s32 32, %v944
        %v946 = vshll.u32 %v937, %v944
        %v947 = vshrl.u32 %v929, %v945
        %v948 = vor.u32 %v946, %v947
        %v949 = vsub.s32 4294967266, %v944
        %v950 = vadd.s32 %v949, 127
        %v951 = vshll.u32 %v950, 23
        %v952 = vor.u32 4788187, %v951
        %v953 = vand.u32 2147483647, %v952
        %v955 = vcvt.s32.f32 %v948
        %v956 = vmul.f32 %v955, %v953
        %v957 = vxor.u32 %v956, 2147483648
        %v958 = vsel %vm875, %v957, %v956
        %v959 = vsub.s32 4, %v935
        %v960 = vsel %vm875, %v959, %v935
        %v961 = vsel %vm874, %v561, %v958
        %v962 = vsel %vm874, 0, %v960
        %v963 = vcosq.f32.pop %v961
        %v964 = vsinq.f32.pop %v961
        %vm965 = vweird.f32 %v561
        %v966 = vand.u32 %v962, 3
        %vm967 = vcmp.lt.s32.totalorder %v966, 2
        %vm968 = vcmp.eq.s32.totalorder %v966, 0
        %v969 = vxor.u32 %v964, 2147483648
        %v970 = vsel %vm968, %v963, %v969
        %vm971 = vcmp.eq.s32.totalorder %v966, 2
        %v972 = vxor.u32 %v963, 2147483648
        %v973 = vsel %vm971, %v972, %v964
        %v974 = vsel %vm967, %v970, %v973
        %v975 = vsel %vm965, nan, %v974
        %v976 = vpack.c.bf16 %v561, %v560
        %v977 = vpack.c.bf16 %v769, %v665
        %v978 = vpack.c.bf16 %v975, %v872
        %v979 = vld [vmem:[%s1] sm:$0xf]
        %v980 = vld [vmem:[%s1 + $0x4] sm:$0xf]
        %v981 = vld [vmem:[%s1 + $0x8] sm:$0xf]
        %v982 = vld [vmem:[%s1 + $0xc] sm:$0xf]
        %v983 = vld [vmem:[%s1 + $0x10] sm:$0xf]
        %v984 = vld [vmem:[%s1 + $0x14] sm:$0xf]
        %v985 = vld [vmem:[%s1 + $0x18] sm:$0xf]
        %v986 = vld [vmem:[%s1 + $0x1c] sm:$0xf]
        %v987 = vld [vmem:[%s2] sm:$0xf]
        %v988 = vld [vmem:[%s2 + $0x4] sm:$0xf]
        %v989 = vld [vmem:[%s2 + $0x8] sm:$0xf]
        %v990 = vld [vmem:[%s2 + $0xc] sm:$0xf]
        %v991 = vld [vmem:[%s2 + $0x10] sm:$0xf]
        %v992 = vld [vmem:[%s2 + $0x14] sm:$0xf]
        %v993 = vld [vmem:[%s2 + $0x18] sm:$0xf]
        %v994 = vld [vmem:[%s2 + $0x1c] sm:$0xf]
        %v1003 = vunpack.c.l.b16 %v987
        %v1004 = vunpack.c.l.b16 %v988
        %v1005 = vunpack.c.l.b16 %v989
        %v1006 = vunpack.c.l.b16 %v990
        %v1007 = vunpack.c.l.b16 %v991
        %v1008 = vunpack.c.l.b16 %v992
        %v1009 = vunpack.c.l.b16 %v993
        %v1010 = vunpack.c.l.b16 %v994
        %v1011 = vpack.c.b16 %v1004, %v1003
        %v1012 = vpack.c.b16 %v1006, %v1005
        %v1013 = vpack.c.b16 %v1008, %v1007
        %v1014 = vpack.c.b16 %v1010, %v1009
        %vm1015 = vcmask 130048
        %v1017 = vsel %vm1015, %v1011, 0
        %v1020 = vsel %vm1015, %v1012, 0
        %v1023 = vsel %vm1015, %v1013, 0
        %v1026 = vsel %vm1015, %v1014, 0
        %1028 = vmatprep.subr.bf16.mxu0 0
        %1029 = vmatpush1.bf16.msra.mxu0 %v977
        %1030 = vmatprep.subr.bf16.mxu0 0
        %1031 = vmatpush1.bf16.msra.mxu0 0
        %1032 = vmatprep.subr.bf16.mxu0 0
        %1033 = vmatpush1.bf16.msra.mxu0 0
        %1034 = vmatprep.subr.bf16.mxu0 0
        %1035 = vmatpush1.bf16.msra.mxu0 0
        %1036 = vmatprep.subr.bf16.mxu0 0
        %1037 = vmatpush1.bf16.msra.mxu0 0
        %1038 = vmatprep.subr.bf16.mxu0 0
        %1039 = vmatpush1.bf16.msra.mxu0 0
        %1040 = vmatprep.subr.bf16.mxu0 0
        %1041 = vmatpush1.bf16.msra.mxu0 0
        %1042 = vmatprep.subr.bf16.mxu0 0
        %1043 = vmatpush1.bf16.msra.mxu0 0
        %1044 = vmatprep.subr.bf16.mxu0 0
        %1045 = vmatpush1.bf16.msra.mxu0 0
        %1046 = vmatprep.subr.bf16.mxu0 0
        %1047 = vmatpush1.bf16.msra.mxu0 0
        %1048 = vmatprep.subr.bf16.mxu0 0
        %1049 = vmatpush1.bf16.msra.mxu0 0
        %1050 = vmatprep.subr.bf16.mxu0 0
        %1051 = vmatpush1.bf16.msra.mxu0 0
        %1052 = vmatprep.subr.bf16.mxu0 0
        %1053 = vmatpush1.bf16.msra.mxu0 0
        %1054 = vmatprep.subr.bf16.mxu0 0
        %1055 = vmatpush1.bf16.msra.mxu0 0
        %1056 = vmatprep.subr.bf16.mxu0 0
        %1057 = vmatpush1.bf16.msra.mxu0 0
        %1058 = vmatprep.subr.bf16.mxu0 0
        %1059 = vmatpush1.bf16.msra.mxu0 0
        %1060 = vmatprep.mubr.bf16.mxu0 0
        %1061 = vmatmul.mubr.bf16.gmra.mrb[0].mxu0 %v1017
        %v1062 = vpop.f32.mrb[0].mxu0
        %v1063 = vadd.f32 0.0, %v1062
        %v1064 = vpop.f32.mrb[0].mxu0
        %v1065 = vpop.f32.mrb[0].mxu0
        %v1066 = vadd.f32 0.0, %v1065
        %v1067 = vpop.f32.mrb[0].mxu0
        %1068 = vmatprep.mubr.bf16.mxu0 0
        %1069 = vmatmul.mubr.bf16.gmra.mrb[0].mxu0 %v1020
        %v1070 = vpop.f32.mrb[0].mxu0
        %v1071 = vadd.f32 0.0, %v1070
        %v1072 = vpop.f32.mrb[0].mxu0
        %v1073 = vpop.f32.mrb[0].mxu0
        %v1074 = vadd.f32 0.0, %v1073
        %v1075 = vpop.f32.mrb[0].mxu0
        %1076 = vmatprep.mubr.bf16.mxu0 0
        %1077 = vmatmul.mubr.bf16.gmra.mrb[0].mxu0 %v1023
        %v1078 = vpop.f32.mrb[0].mxu0
        %v1079 = vadd.f32 0.0, %v1078
        %v1080 = vpop.f32.mrb[0].mxu0
        %v1081 = vpop.f32.mrb[0].mxu0
        %v1082 = vadd.f32 0.0, %v1081
        %v1083 = vpop.f32.mrb[0].mxu0
        %1084 = vmatprep.mubr.bf16.mxu0 0
        %1085 = vmatmul.mubr.bf16.gmra.mrb[0].mxu0 %v1026
        %v1086 = vpop.f32.mrb[0].mxu0
        %v1087 = vadd.f32 0.0, %v1086
        %v1088 = vpop.f32.mrb[0].mxu0
        %v1089 = vpop.f32.mrb[0].mxu0
        %v1090 = vadd.f32 0.0, %v1089
        %v1091 = vpop.f32.mrb[0].mxu0
        %1092 = vdwg.mxu0
        %v1101 = vunpack.c.l.b16 %v979
        %v1102 = vunpack.c.l.b16 %v980
        %v1103 = vunpack.c.l.b16 %v981
        %v1104 = vunpack.c.l.b16 %v982
        %v1105 = vunpack.c.l.b16 %v983
        %v1106 = vunpack.c.l.b16 %v984
        %v1107 = vunpack.c.l.b16 %v985
        %v1108 = vunpack.c.l.b16 %v986
        %v1109 = vpack.c.b16 %v1102, %v1101
        %v1110 = vpack.c.b16 %v1104, %v1103
        %v1111 = vpack.c.b16 %v1106, %v1105
        %v1112 = vpack.c.b16 %v1108, %v1107
        %v1114 = vsel %vm1015, %v1109, 0
        %v1117 = vsel %vm1015, %v1110, 0
        %v1120 = vsel %vm1015, %v1111, 0
        %v1123 = vsel %vm1015, %v1112, 0
        %1125 = vmatprep.subr.bf16.mxu0 0
        %1126 = vmatpush1.bf16.msra.mxu0 %v976
        %1127 = vmatprep.subr.bf16.mxu0 0
        %1128 = vmatpush1.bf16.msra.mxu0 0
        %1129 = vmatprep.subr.bf16.mxu0 0
        %1130 = vmatpush1.bf16.msra.mxu0 0
        %1131 = vmatprep.subr.bf16.mxu0 0
        %1132 = vmatpush1.bf16.msra.mxu0 0
        %1133 = vmatprep.subr.bf16.mxu0 0
        %1134 = vmatpush1.bf16.msra.mxu0 0
        %1135 = vmatprep.subr.bf16.mxu0 0
        %1136 = vmatpush1.bf16.msra.mxu0 0
        %1137 = vmatprep.subr.bf16.mxu0 0
        %1138 = vmatpush1.bf16.msra.mxu0 0
        %1139 = vmatprep.subr.bf16.mxu0 0
        %1140 = vmatpush1.bf16.msra.mxu0 0
        %1141 = vmatprep.subr.bf16.mxu0 0
        %1142 = vmatpush1.bf16.msra.mxu0 0
        %1143 = vmatprep.subr.bf16.mxu0 0
        %1144 = vmatpush1.bf16.msra.mxu0 0
        %1145 = vmatprep.subr.bf16.mxu0 0
        %1146 = vmatpush1.bf16.msra.mxu0 0
        %1147 = vmatprep.subr.bf16.mxu0 0
        %1148 = vmatpush1.bf16.msra.mxu0 0
        %1149 = vmatprep.subr.bf16.mxu0 0
        %1150 = vmatpush1.bf16.msra.mxu0 0
        %1151 = vmatprep.subr.bf16.mxu0 0
        %1152 = vmatpush1.bf16.msra.mxu0 0
        %1153 = vmatprep.subr.bf16.mxu0 0
        %1154 = vmatpush1.bf16.msra.mxu0 0
        %1155 = vmatprep.subr.bf16.mxu0 0
        %1156 = vmatpush1.bf16.msra.mxu0 0
        %1157 = vmatprep.mubr.bf16.mxu0 0
        %1158 = vmatmul.mubr.bf16.gmra.mrb[0].mxu0 %v1114
        %v1159 = vpop.f32.mrb[0].mxu0
        %v1160 = vadd.f32 %v1063, %v1159
        %v1161 = vpop.f32.mrb[0].mxu0
        %v1162 = vpop.f32.mrb[0].mxu0
        %v1163 = vadd.f32 %v1066, %v1162
        %v1164 = vpop.f32.mrb[0].mxu0
        %1165 = vmatprep.mubr.bf16.mxu0 0
        %1166 = vmatmul.mubr.bf16.gmra.mrb[0].mxu0 %v1117
        %v1167 = vpop.f32.mrb[0].mxu0
        %v1168 = vadd.f32 %v1071, %v1167
        %v1169 = vpop.f32.mrb[0].mxu0
        %v1170 = vpop.f32.mrb[0].mxu0
        %v1171 = vadd.f32 %v1074, %v1170
        %v1172 = vpop.f32.mrb[0].mxu0
        %1173 = vmatprep.mubr.bf16.mxu0 0
        %1174 = vmatmul.mubr.bf16.gmra.mrb[0].mxu0 %v1120
        %v1175 = vpop.f32.mrb[0].mxu0
        %v1176 = vadd.f32 %v1079, %v1175
        %v1177 = vpop.f32.mrb[0].mxu0
        %v1178 = vpop.f32.mrb[0].mxu0
        %v1179 = vadd.f32 %v1082, %v1178
        %v1180 = vpop.f32.mrb[0].mxu0
        %1181 = vmatprep.mubr.bf16.mxu0 0
        %1182 = vmatmul.mubr.bf16.gmra.mrb[0].mxu0 %v1123
        %v1183 = vpop.f32.mrb[0].mxu0
        %v1184 = vadd.f32 %v1087, %v1183
        %v1185 = vpop.f32.mrb[0].mxu0
        %v1186 = vpop.f32.mrb[0].mxu0
        %v1187 = vadd.f32 %v1090, %v1186
        %v1188 = vpop.f32.mrb[0].mxu0
        %1189 = vdwg.mxu0
        %v1190 = vld [vmem:[%s3] sm:$0xf]
        %v1191 = vld [vmem:[%s3 + $0x4] sm:$0xf]
        %v1192 = vld [vmem:[%s3 + $0x8] sm:$0xf]
        %v1193 = vld [vmem:[%s3 + $0xc] sm:$0xf]
        %v1194 = vld [vmem:[%s3 + $0x10] sm:$0xf]
        %v1195 = vld [vmem:[%s3 + $0x14] sm:$0xf]
        %v1196 = vld [vmem:[%s3 + $0x18] sm:$0xf]
        %v1197 = vld [vmem:[%s3 + $0x1c] sm:$0xf]
        %v1206 = vunpack.c.l.b16 %v1190
        %v1207 = vunpack.c.l.b16 %v1191
        %v1208 = vunpack.c.l.b16 %v1192
        %v1209 = vunpack.c.l.b16 %v1193
        %v1210 = vunpack.c.l.b16 %v1194
        %v1211 = vunpack.c.l.b16 %v1195
        %v1212 = vunpack.c.l.b16 %v1196
        %v1213 = vunpack.c.l.b16 %v1197
        %v1214 = vpack.c.b16 %v1207, %v1206
        %v1215 = vpack.c.b16 %v1209, %v1208
        %v1216 = vpack.c.b16 %v1211, %v1210
        %v1217 = vpack.c.b16 %v1213, %v1212
        %v1219 = vsel %vm1015, %v1214, 0
        %v1222 = vsel %vm1015, %v1215, 0
        %v1225 = vsel %vm1015, %v1216, 0
        %v1228 = vsel %vm1015, %v1217, 0
        %1230 = vmatprep.subr.bf16.mxu0 0
        %1231 = vmatpush1.bf16.msra.mxu0 %v978
        %1232 = vmatprep.subr.bf16.mxu0 0
        %1233 = vmatpush1.bf16.msra.mxu0 0
        %1234 = vmatprep.subr.bf16.mxu0 0
        %1235 = vmatpush1.bf16.msra.mxu0 0
        %1236 = vmatprep.subr.bf16.mxu0 0
        %1237 = vmatpush1.bf16.msra.mxu0 0
        %1238 = vmatprep.subr.bf16.mxu0 0
        %1239 = vmatpush1.bf16.msra.mxu0 0
        %1240 = vmatprep.subr.bf16.mxu0 0
        %1241 = vmatpush1.bf16.msra.mxu0 0
        %1242 = vmatprep.subr.bf16.mxu0 0
        %1243 = vmatpush1.bf16.msra.mxu0 0
        %1244 = vmatprep.subr.bf16.mxu0 0
        %1245 = vmatpush1.bf16.msra.mxu0 0
        %1246 = vmatprep.subr.bf16.mxu0 0
        %1247 = vmatpush1.bf16.msra.mxu0 0
        %1248 = vmatprep.subr.bf16.mxu0 0
        %1249 = vmatpush1.bf16.msra.mxu0 0
        %1250 = vmatprep.subr.bf16.mxu0 0
        %1251 = vmatpush1.bf16.msra.mxu0 0
        %1252 = vmatprep.subr.bf16.mxu0 0
        %1253 = vmatpush1.bf16.msra.mxu0 0
        %1254 = vmatprep.subr.bf16.mxu0 0
        %1255 = vmatpush1.bf16.msra.mxu0 0
        %1256 = vmatprep.subr.bf16.mxu0 0
        %1257 = vmatpush1.bf16.msra.mxu0 0
        %1258 = vmatprep.subr.bf16.mxu0 0
        %1259 = vmatpush1.bf16.msra.mxu0 0
        %1260 = vmatprep.subr.bf16.mxu0 0
        %1261 = vmatpush1.bf16.msra.mxu0 0
        %1262 = vmatprep.mubr.bf16.mxu0 0
        %1263 = vmatmul.mubr.bf16.gmra.mrb[0].mxu0 %v1219
        %v1264 = vpop.f32.mrb[0].mxu0
        %v1265 = vadd.f32 0.0, %v1264
        %v1266 = vpop.f32.mrb[0].mxu0
        %v1267 = vpop.f32.mrb[0].mxu0
        %v1268 = vadd.f32 0.0, %v1267
        %v1269 = vpop.f32.mrb[0].mxu0
        %1270 = vmatprep.mubr.bf16.mxu0 0
        %1271 = vmatmul.mubr.bf16.gmra.mrb[0].mxu0 %v1222
        %v1272 = vpop.f32.mrb[0].mxu0
        %v1273 = vadd.f32 0.0, %v1272
        %v1274 = vpop.f32.mrb[0].mxu0
        %v1275 = vpop.f32.mrb[0].mxu0
        %v1276 = vadd.f32 0.0, %v1275
        %v1277 = vpop.f32.mrb[0].mxu0
        %1278 = vmatprep.mubr.bf16.mxu0 0
        %1279 = vmatmul.mubr.bf16.gmra.mrb[0].mxu0 %v1225
        %v1280 = vpop.f32.mrb[0].mxu0
        %v1281 = vadd.f32 0.0, %v1280
        %v1282 = vpop.f32.mrb[0].mxu0
        %v1283 = vpop.f32.mrb[0].mxu0
        %v1284 = vadd.f32 0.0, %v1283
        %v1285 = vpop.f32.mrb[0].mxu0
        %1286 = vmatprep.mubr.bf16.mxu0 0
        %1287 = vmatmul.mubr.bf16.gmra.mrb[0].mxu0 %v1228
        %v1288 = vpop.f32.mrb[0].mxu0
        %v1289 = vadd.f32 0.0, %v1288
        %v1290 = vpop.f32.mrb[0].mxu0
        %v1291 = vpop.f32.mrb[0].mxu0
        %v1292 = vadd.f32 0.0, %v1291
        %v1293 = vpop.f32.mrb[0].mxu0
        %1294 = vdwg.mxu0
        %v1295 = vadd.f32 %v1160, %v1265
        %v1296 = vadd.f32 %v1163, %v1268
        %v1297 = vadd.f32 %v1168, %v1273
        %v1298 = vadd.f32 %v1171, %v1276
        %v1299 = vadd.f32 %v1176, %v1281
        %v1300 = vadd.f32 %v1179, %v1284
        %v1301 = vadd.f32 %v1184, %v1289
        %v1302 = vadd.f32 %v1187, %v1292
        %v1303 = vld [vmem:[%s4] sm:$0xff]
        %v1304 = vld [vmem:[%s4 + $0x8] sm:$0xff]
        %v1305 = vld [vmem:[%s4 + $0x10] sm:$0xff]
        %v1306 = vld [vmem:[%s4 + $0x18] sm:$0xff]
        %v1307 = vld [vmem:[%s4 + $0x20] sm:$0xff]
        %v1308 = vld [vmem:[%s4 + $0x28] sm:$0xff]
        %v1309 = vld [vmem:[%s4 + $0x30] sm:$0xff]
        %v1310 = vld [vmem:[%s4 + $0x38] sm:$0xff]
        %1312 = vset.pattern.permute.xlu0 0
        %1313 = vperm.xlu0 %1312, %v1303
        %v1314 = vpop.permute.xlu0 %1313
        %1317 = vset.pattern.permute.xlu0 0
        %1318 = vperm.xlu0 %1317, %v1304
        %v1319 = vpop.permute.xlu0 %1318
        %1322 = vset.pattern.permute.xlu0 0
        %1323 = vperm.xlu0 %1322, %v1305
        %v1324 = vpop.permute.xlu0 %1323
        %1327 = vset.pattern.permute.xlu0 0
        %1328 = vperm.xlu0 %1327, %v1306
        %v1329 = vpop.permute.xlu0 %1328
        %1332 = vset.pattern.permute.xlu0 0
        %1333 = vperm.xlu0 %1332, %v1307
        %v1334 = vpop.permute.xlu0 %1333
        %1337 = vset.pattern.permute.xlu0 0
        %1338 = vperm.xlu0 %1337, %v1308
        %v1339 = vpop.permute.xlu0 %1338
        %1342 = vset.pattern.permute.xlu0 0
        %1343 = vperm.xlu0 %1342, %v1309
        %v1344 = vpop.permute.xlu0 %1343
        %1347 = vset.pattern.permute.xlu0 0
        %1348 = vperm.xlu0 %1347, %v1310
        %v1349 = vpop.permute.xlu0 %1348
        %v1351 = vadd.f32 %v1295, %v1314
        %v1352 = vadd.f32 %v1296, %v1319
        %v1353 = vadd.f32 %v1297, %v1324
        %v1354 = vadd.f32 %v1298, %v1329
        %v1355 = vadd.f32 %v1299, %v1334
        %v1356 = vadd.f32 %v1300, %v1339
        %v1357 = vadd.f32 %v1301, %v1344
        %v1358 = vadd.f32 %v1302, %v1349
        %v1359 = vmul.f32 %v1351, 100.0
        %v1360 = vmul.f32 %v1352, 100.0
        %v1361 = vmul.f32 %v1353, 100.0
        %v1362 = vmul.f32 %v1354, 100.0
        %v1363 = vmul.f32 %v1355, 100.0
        %v1364 = vmul.f32 %v1356, 100.0
        %v1365 = vmul.f32 %v1357, 100.0
        %v1366 = vmul.f32 %v1358, 100.0
        %v1367 = vmin.f32 %v1359, 20.0
        %v1368 = vmin.f32 %v1360, 20.0
        %v1369 = vmin.f32 %v1361, 20.0
        %v1370 = vmin.f32 %v1362, 20.0
        %v1371 = vmin.f32 %v1363, 20.0
        %v1372 = vmin.f32 %v1364, 20.0
        %v1373 = vmin.f32 %v1365, 20.0
        %v1374 = vmin.f32 %v1366, 20.0
        %vm1375 = vcmp.gt.f32.partialorder %v1359, 20.0
        %vm1376 = vcmp.gt.f32.partialorder %v1360, 20.0
        %vm1377 = vcmp.gt.f32.partialorder %v1361, 20.0
        %vm1378 = vcmp.gt.f32.partialorder %v1362, 20.0
        %vm1379 = vcmp.gt.f32.partialorder %v1363, 20.0
        %vm1380 = vcmp.gt.f32.partialorder %v1364, 20.0
        %vm1381 = vcmp.gt.f32.partialorder %v1365, 20.0
        %vm1382 = vcmp.gt.f32.partialorder %v1366, 20.0
        %v1383 = vmul.f32 %v1367, 1.442695
        %v1384 = vpow.pop %v1383
        %v1385 = vmul.f32 %v1368, 1.442695
        %v1386 = vpow.pop %v1385
        %v1387 = vmul.f32 %v1369, 1.442695
        %v1388 = vpow.pop %v1387
        %v1389 = vmul.f32 %v1370, 1.442695
        %v1390 = vpow.pop %v1389
        %v1391 = vmul.f32 %v1371, 1.442695
        %v1392 = vpow.pop %v1391
        %v1393 = vmul.f32 %v1372, 1.442695
        %v1394 = vpow.pop %v1393
        %v1395 = vmul.f32 %v1373, 1.442695
        %v1396 = vpow.pop %v1395
        %v1397 = vmul.f32 %v1374, 1.442695
        %v1398 = vpow.pop %v1397
        %v1399 = vadd.f32 %v1384, 1.0
        %v1400 = vlog2.pop %v1399
        %v1401 = vmul.f32 %v1400, 0.6931472
        %v1402 = vmul.f32 -0.5, %v1384
        %v1403 = vadd.f32 %v1402, 1.0
        %v1404 = vmul.f32 %v1403, %v1384
        %v1405 = vand.u32 2147483647, %v1384
        %vm1406 = vcmp.lt.f32.partialorder %v1405, 0.0004427343
        %v1407 = vsel %vm1406, %v1404, %v1401
        %v1408 = vadd.f32 %v1386, 1.0
        %v1409 = vlog2.pop %v1408
        %v1410 = vmul.f32 %v1409, 0.6931472
        %v1411 = vmul.f32 -0.5, %v1386
        %v1412 = vadd.f32 %v1411, 1.0
        %v1413 = vmul.f32 %v1412, %v1386
        %v1414 = vand.u32 2147483647, %v1386
        %vm1415 = vcmp.lt.f32.partialorder %v1414, 0.0004427343
        %v1416 = vsel %vm1415, %v1413, %v1410
        %v1417 = vadd.f32 %v1388, 1.0
        %v1418 = vlog2.pop %v1417
        %v1419 = vmul.f32 %v1418, 0.6931472
        %v1420 = vmul.f32 -0.5, %v1388
        %v1421 = vadd.f32 %v1420, 1.0
        %v1422 = vmul.f32 %v1421, %v1388
        %v1423 = vand.u32 2147483647, %v1388
        %vm1424 = vcmp.lt.f32.partialorder %v1423, 0.0004427343
        %v1425 = vsel %vm1424, %v1422, %v1419
        %v1426 = vadd.f32 %v1390, 1.0
        %v1427 = vlog2.pop %v1426
        %v1428 = vmul.f32 %v1427, 0.6931472
        %v1429 = vmul.f32 -0.5, %v1390
        %v1430 = vadd.f32 %v1429, 1.0
        %v1431 = vmul.f32 %v1430, %v1390
        %v1432 = vand.u32 2147483647, %v1390
        %vm1433 = vcmp.lt.f32.partialorder %v1432, 0.0004427343
        %v1434 = vsel %vm1433, %v1431, %v1428
        %v1435 = vadd.f32 %v1392, 1.0
        %v1436 = vlog2.pop %v1435
        %v1437 = vmul.f32 %v1436, 0.6931472
        %v1438 = vmul.f32 -0.5, %v1392
        %v1439 = vadd.f32 %v1438, 1.0
        %v1440 = vmul.f32 %v1439, %v1392
        %v1441 = vand.u32 2147483647, %v1392
        %vm1442 = vcmp.lt.f32.partialorder %v1441, 0.0004427343
        %v1443 = vsel %vm1442, %v1440, %v1437
        %v1444 = vadd.f32 %v1394, 1.0
        %v1445 = vlog2.pop %v1444
        %v1446 = vmul.f32 %v1445, 0.6931472
        %v1447 = vmul.f32 -0.5, %v1394
        %v1448 = vadd.f32 %v1447, 1.0
        %v1449 = vmul.f32 %v1448, %v1394
        %v1450 = vand.u32 2147483647, %v1394
        %vm1451 = vcmp.lt.f32.partialorder %v1450, 0.0004427343
        %v1452 = vsel %vm1451, %v1449, %v1446
        %v1453 = vadd.f32 %v1396, 1.0
        %v1454 = vlog2.pop %v1453
        %v1455 = vmul.f32 %v1454, 0.6931472
        %v1456 = vmul.f32 -0.5, %v1396
        %v1457 = vadd.f32 %v1456, 1.0
        %v1458 = vmul.f32 %v1457, %v1396
        %v1459 = vand.u32 2147483647, %v1396
        %vm1460 = vcmp.lt.f32.partialorder %v1459, 0.0004427343
        %v1461 = vsel %vm1460, %v1458, %v1455
        %v1462 = vadd.f32 %v1398, 1.0
        %v1463 = vlog2.pop %v1462
        %v1464 = vmul.f32 %v1463, 0.6931472
        %v1465 = vmul.f32 -0.5, %v1398
        %v1466 = vadd.f32 %v1465, 1.0
        %v1467 = vmul.f32 %v1466, %v1398
        %v1468 = vand.u32 2147483647, %v1398
        %vm1469 = vcmp.lt.f32.partialorder %v1468, 0.0004427343
        %v1470 = vsel %vm1469, %v1467, %v1464
        %v1471 = vmul.f32 %v1407, 0.01
        %v1472 = vmul.f32 %v1416, 0.01
        %v1473 = vmul.f32 %v1425, 0.01
        %v1474 = vmul.f32 %v1434, 0.01
        %v1475 = vmul.f32 %v1443, 0.01
        %v1476 = vmul.f32 %v1452, 0.01
        %v1477 = vmul.f32 %v1461, 0.01
        %v1478 = vmul.f32 %v1470, 0.01
        %v1479 = vsel %vm1375, %v1351, %v1471
        %v1480 = vsel %vm1376, %v1352, %v1472
        %v1481 = vsel %vm1377, %v1353, %v1473
        %v1482 = vsel %vm1378, %v1354, %v1474
        %v1483 = vsel %vm1379, %v1355, %v1475
        %v1484 = vsel %vm1380, %v1356, %v1476
        %v1485 = vsel %vm1381, %v1357, %v1477
        %v1486 = vsel %vm1382, %v1358, %v1478
        %v1487 = vpack.c.bf16 %v1480, %v1479
        %v1488 = vpack.c.bf16 %v1482, %v1481
        %v1489 = vpack.c.bf16 %v1484, %v1483
        %v1490 = vpack.c.bf16 %v1486, %v1485
        %v1491 = vld [vmem:[%s5] sm:$0xf]
        %v1492 = vld [vmem:[%s5 + $0x4] sm:$0xf]
        %v1493 = vld [vmem:[%s5 + $0x8] sm:$0xf]
        %v1494 = vld [vmem:[%s5 + $0xc] sm:$0xf]
        %v1495 = vld [vmem:[%s5 + $0x10] sm:$0xf]
        %v1496 = vld [vmem:[%s6] sm:$0xff]
        %v1497 = vld [vmem:[%s6 + $0x8] sm:$0xff]
        %v1498 = vld [vmem:[%s6 + $0x10] sm:$0xff]
        %v1499 = vld [vmem:[%s6 + $0x18] sm:$0xff]
        %v1500 = vld [vmem:[%s6 + $0x20] sm:$0xff]
        %1502 = vset.pattern.permute.xlu0 0
        %1503 = vperm.xlu0 %1502, %v1496
        %v1504 = vpop.permute.xlu0 %1503
        %1507 = vset.pattern.permute.xlu0 0
        %1508 = vperm.xlu0 %1507, %v1497
        %v1509 = vpop.permute.xlu0 %1508
        %1512 = vset.pattern.permute.xlu0 0
        %1513 = vperm.xlu0 %1512, %v1498
        %v1514 = vpop.permute.xlu0 %1513
        %1517 = vset.pattern.permute.xlu0 0
        %1518 = vperm.xlu0 %1517, %v1499
        %v1519 = vpop.permute.xlu0 %1518
        %1522 = vset.pattern.permute.xlu0 0
        %1523 = vperm.xlu0 %1522, %v1500
        %v1524 = vpop.permute.xlu0 %1523
        %v1531 = vunpack.c.l.b16 %v1491
        %v1532 = vunpack.c.l.b16 %v1492
        %v1533 = vunpack.c.l.b16 %v1493
        %v1534 = vunpack.c.l.b16 %v1494
        %v1535 = vunpack.c.l.b16 %v1495
        %v1536 = vpack.c.b16 %v1532, %v1531
        %v1537 = vpack.c.b16 %v1534, %v1533
        %v1538 = vpack.c.b16 %v1535, %v1535
        %vm1539 = vcmask 523264
        %v1541 = vsel %vm1539, %v1536, 0
        %v1544 = vsel %vm1539, %v1537, 0
        %v1547 = vsel %vm1539, %v1538, 0
        %1549 = vmatprep.subr.bf16.mxu0 0
        %1550 = vmatpush1.bf16.msra.mxu0 %v1487
        %1551 = vmatprep.subr.bf16.mxu0 0
        %1552 = vmatpush1.bf16.msra.mxu0 %v1488
        %1553 = vmatprep.subr.bf16.mxu0 0
        %1554 = vmatpush1.bf16.msra.mxu0 %v1489
        %1555 = vmatprep.subr.bf16.mxu0 0
        %1556 = vmatpush1.bf16.msra.mxu0 %v1490
        %1557 = vmatprep.subr.bf16.mxu0 0
        %1558 = vmatpush1.bf16.msra.mxu0 0
        %1559 = vmatprep.subr.bf16.mxu0 0
        %1560 = vmatpush1.bf16.msra.mxu0 0
        %1561 = vmatprep.subr.bf16.mxu0 0
        %1562 = vmatpush1.bf16.msra.mxu0 0
        %1563 = vmatprep.subr.bf16.mxu0 0
        %1564 = vmatpush1.bf16.msra.mxu0 0
        %1565 = vmatprep.subr.bf16.mxu0 0
        %1566 = vmatpush1.bf16.msra.mxu0 0
        %1567 = vmatprep.subr.bf16.mxu0 0
        %1568 = vmatpush1.bf16.msra.mxu0 0
        %1569 = vmatprep.subr.bf16.mxu0 0
        %1570 = vmatpush1.bf16.msra.mxu0 0
        %1571 = vmatprep.subr.bf16.mxu0 0
        %1572 = vmatpush1.bf16.msra.mxu0 0
        %1573 = vmatprep.subr.bf16.mxu0 0
        %1574 = vmatpush1.bf16.msra.mxu0 0
        %1575 = vmatprep.subr.bf16.mxu0 0
        %1576 = vmatpush1.bf16.msra.mxu0 0
        %1577 = vmatprep.subr.bf16.mxu0 0
        %1578 = vmatpush1.bf16.msra.mxu0 0
        %1579 = vmatprep.subr.bf16.mxu0 0
        %1580 = vmatpush1.bf16.msra.mxu0 0
        %1581 = vmatprep.mubr.bf16.mxu0 0
        %1582 = vmatmul.mubr.bf16.gmra.mrb[0].mxu0 %v1541
        %v1583 = vpop.f32.mrb[0].mxu0
        %v1584 = vadd.f32 %v1504, %v1583
        %v1585 = vpop.f32.mrb[0].mxu0
        %v1586 = vpop.f32.mrb[0].mxu0
        %v1587 = vadd.f32 %v1509, %v1586
        %v1588 = vpop.f32.mrb[0].mxu0
        %1589 = vmatprep.mubr.bf16.mxu0 0
        %1590 = vmatmul.mubr.bf16.gmra.mrb[0].mxu0 %v1544
        %v1591 = vpop.f32.mrb[0].mxu0
        %v1592 = vadd.f32 %v1514, %v1591
        %v1593 = vpop.f32.mrb[0].mxu0
        %v1594 = vpop.f32.mrb[0].mxu0
        %v1595 = vadd.f32 %v1519, %v1594
        %v1596 = vpop.f32.mrb[0].mxu0
        %1597 = vmatprep.mubr.bf16.mxu0 0
        %1598 = vmatmul.mubr.bf16.gmra.mrb[0].mxu0 %v1547
        %v1599 = vpop.f32.mrb[0].mxu0
        %v1600 = vadd.f32 %v1524, %v1599
        %v1601 = vpop.f32.mrb[0].mxu0
        %v1602 = vpop.f32.mrb[0].mxu0
        %v1603 = vpop.f32.mrb[0].mxu0
        %1604 = vdwg.mxu0
        %v1605 = vmul.f32 %v1584, 100.0
        %v1606 = vmul.f32 %v1587, 100.0
        %v1607 = vmul.f32 %v1592, 100.0
        %v1608 = vmul.f32 %v1595, 100.0
        %v1609 = vmul.f32 %v1600, 100.0
        %v1610 = vmin.f32 %v1605, 20.0
        %v1611 = vmin.f32 %v1606, 20.0
        %v1612 = vmin.f32 %v1607, 20.0
        %v1613 = vmin.f32 %v1608, 20.0
        %v1614 = vmin.f32 %v1609, 20.0
        %vm1615 = vcmp.gt.f32.partialorder %v1605, 20.0
        %vm1616 = vcmp.gt.f32.partialorder %v1606, 20.0
        %vm1617 = vcmp.gt.f32.partialorder %v1607, 20.0
        %vm1618 = vcmp.gt.f32.partialorder %v1608, 20.0
        %vm1619 = vcmp.gt.f32.partialorder %v1609, 20.0
        %v1620 = vmul.f32 %v1610, 1.442695
        %v1621 = vpow.pop %v1620
        %v1622 = vmul.f32 %v1611, 1.442695
        %v1623 = vpow.pop %v1622
        %v1624 = vmul.f32 %v1612, 1.442695
        %v1625 = vpow.pop %v1624
        %v1626 = vmul.f32 %v1613, 1.442695
        %v1627 = vpow.pop %v1626
        %v1628 = vmul.f32 %v1614, 1.442695
        %v1629 = vpow.pop %v1628
        %v1630 = vadd.f32 %v1621, 1.0
        %v1631 = vlog2.pop %v1630
        %v1632 = vmul.f32 %v1631, 0.6931472
        %v1633 = vmul.f32 -0.5, %v1621
        %v1634 = vadd.f32 %v1633, 1.0
        %v1635 = vmul.f32 %v1634, %v1621
        %v1636 = vand.u32 2147483647, %v1621
        %vm1637 = vcmp.lt.f32.partialorder %v1636, 0.0004427343
        %v1638 = vsel %vm1637, %v1635, %v1632
        %v1639 = vadd.f32 %v1623, 1.0
        %v1640 = vlog2.pop %v1639
        %v1641 = vmul.f32 %v1640, 0.6931472
        %v1642 = vmul.f32 -0.5, %v1623
        %v1643 = vadd.f32 %v1642, 1.0
        %v1644 = vmul.f32 %v1643, %v1623
        %v1645 = vand.u32 2147483647, %v1623
        %vm1646 = vcmp.lt.f32.partialorder %v1645, 0.0004427343
        %v1647 = vsel %vm1646, %v1644, %v1641
        %v1648 = vadd.f32 %v1625, 1.0
        %v1649 = vlog2.pop %v1648
        %v1650 = vmul.f32 %v1649, 0.6931472
        %v1651 = vmul.f32 -0.5, %v1625
        %v1652 = vadd.f32 %v1651, 1.0
        %v1653 = vmul.f32 %v1652, %v1625
        %v1654 = vand.u32 2147483647, %v1625
        %vm1655 = vcmp.lt.f32.partialorder %v1654, 0.0004427343
        %v1656 = vsel %vm1655, %v1653, %v1650
        %v1657 = vadd.f32 %v1627, 1.0
        %v1658 = vlog2.pop %v1657
        %v1659 = vmul.f32 %v1658, 0.6931472
        %v1660 = vmul.f32 -0.5, %v1627
        %v1661 = vadd.f32 %v1660, 1.0
        %v1662 = vmul.f32 %v1661, %v1627
        %v1663 = vand.u32 2147483647, %v1627
        %vm1664 = vcmp.lt.f32.partialorder %v1663, 0.0004427343
        %v1665 = vsel %vm1664, %v1662, %v1659
        %v1666 = vadd.f32 %v1629, 1.0
        %v1667 = vlog2.pop %v1666
        %v1668 = vmul.f32 %v1667, 0.6931472
        %v1669 = vmul.f32 -0.5, %v1629
        %v1670 = vadd.f32 %v1669, 1.0
        %v1671 = vmul.f32 %v1670, %v1629
        %v1672 = vand.u32 2147483647, %v1629
        %vm1673 = vcmp.lt.f32.partialorder %v1672, 0.0004427343
        %v1674 = vsel %vm1673, %v1671, %v1668
        %v1675 = vmul.f32 %v1638, 0.01
        %v1676 = vmul.f32 %v1647, 0.01
        %v1677 = vmul.f32 %v1656, 0.01
        %v1678 = vmul.f32 %v1665, 0.01
        %v1679 = vmul.f32 %v1674, 0.01
        %v1680 = vsel %vm1615, %v1584, %v1675
        %v1681 = vsel %vm1616, %v1587, %v1676
        %v1682 = vsel %vm1617, %v1592, %v1677
        %v1683 = vsel %vm1618, %v1595, %v1678
        %v1684 = vsel %vm1619, %v1600, %v1679
        %v1685 = vpack.c.bf16 %v1681, %v1680
        %v1686 = vpack.c.bf16 %v1683, %v1682
        %v1687 = vpack.c.bf16 %v1684, %v1684
        %v1688 = vld [vmem:[%s7] sm:$0xf]
        %v1689 = vld [vmem:[%s7 + $0x4] sm:$0xf]
        %v1690 = vld [vmem:[%s7 + $0x8] sm:$0xf]
        %v1691 = vld [vmem:[%s7 + $0xc] sm:$0xf]
        %v1692 = vld [vmem:[%s7 + $0x10] sm:$0xf]
        %v1693 = vld [vmem:[%s7 + $0x14] sm:$0xf]
        %v1694 = vld [vmem:[%s7 + $0x18] sm:$0xf]
        %v1695 = vld [vmem:[%s7 + $0x1c] sm:$0xf]
        %v1696 = vld [vmem:[%s8] sm:$0xf]
        %v1697 = vld [vmem:[%s8 + $0x4] sm:$0xf]
        %v1698 = vld [vmem:[%s8 + $0x8] sm:$0xf]
        %v1699 = vld [vmem:[%s8 + $0xc] sm:$0xf]
        %v1700 = vld [vmem:[%s8 + $0x10] sm:$0xf]
        %v1701 = vld [vmem:[%s8 + $0x14] sm:$0xf]
        %v1702 = vld [vmem:[%s8 + $0x18] sm:$0xf]
        %v1703 = vld [vmem:[%s8 + $0x1c] sm:$0xf]
        %v1712 = vunpack.c.l.b16 %v1696
        %v1713 = vunpack.c.l.b16 %v1697
        %v1714 = vunpack.c.l.b16 %v1698
        %v1715 = vunpack.c.l.b16 %v1699
        %v1716 = vunpack.c.l.b16 %v1700
        %v1717 = vunpack.c.l.b16 %v1701
        %v1718 = vunpack.c.l.b16 %v1702
        %v1719 = vunpack.c.l.b16 %v1703
        %v1720 = vpack.c.b16 %v1713, %v1712
        %v1721 = vpack.c.b16 %v1715, %v1714
        %v1722 = vpack.c.b16 %v1717, %v1716
        %v1723 = vpack.c.b16 %v1719, %v1718
        %v1725 = vsel %vm1015, %v1720, 0
        %v1728 = vsel %vm1015, %v1721, 0
        %v1731 = vsel %vm1015, %v1722, 0
        %v1734 = vsel %vm1015, %v1723, 0
        %1736 = vmatprep.subr.bf16.mxu0 0
        %1737 = vmatpush1.bf16.msra.mxu0 %v976
        %1738 = vmatprep.subr.bf16.mxu0 0
        %1739 = vmatpush1.bf16.msra.mxu0 0
        %1740 = vmatprep.subr.bf16.mxu0 0
        %1741 = vmatpush1.bf16.msra.mxu0 0
        %1742 = vmatprep.subr.bf16.mxu0 0
        %1743 = vmatpush1.bf16.msra.mxu0 0
        %1744 = vmatprep.subr.bf16.mxu0 0
        %1745 = vmatpush1.bf16.msra.mxu0 0
        %1746 = vmatprep.subr.bf16.mxu0 0
        %1747 = vmatpush1.bf16.msra.mxu0 0
        %1748 = vmatprep.subr.bf16.mxu0 0
        %1749 = vmatpush1.bf16.msra.mxu0 0
        %1750 = vmatprep.subr.bf16.mxu0 0
        %1751 = vmatpush1.bf16.msra.mxu0 0
        %1752 = vmatprep.subr.bf16.mxu0 0
        %1753 = vmatpush1.bf16.msra.mxu0 0
        %1754 = vmatprep.subr.bf16.mxu0 0
        %1755 = vmatpush1.bf16.msra.mxu0 0
        %1756 = vmatprep.subr.bf16.mxu0 0
        %1757 = vmatpush1.bf16.msra.mxu0 0
        %1758 = vmatprep.subr.bf16.mxu0 0
        %1759 = vmatpush1.bf16.msra.mxu0 0
        %1760 = vmatprep.subr.bf16.mxu0 0
        %1761 = vmatpush1.bf16.msra.mxu0 0
        %1762 = vmatprep.subr.bf16.mxu0 0
        %1763 = vmatpush1.bf16.msra.mxu0 0
        %1764 = vmatprep.subr.bf16.mxu0 0
        %1765 = vmatpush1.bf16.msra.mxu0 0
        %1766 = vmatprep.subr.bf16.mxu0 0
        %1767 = vmatpush1.bf16.msra.mxu0 0
        %1768 = vmatprep.mubr.bf16.mxu0 0
        %1769 = vmatmul.mubr.bf16.gmra.mrb[0].mxu0 %v1725
        %v1770 = vpop.f32.mrb[0].mxu0
        %v1771 = vadd.f32 0.0, %v1770
        %v1772 = vpop.f32.mrb[0].mxu0
        %v1773 = vpop.f32.mrb[0].mxu0
        %v1774 = vadd.f32 0.0, %v1773
        %v1775 = vpop.f32.mrb[0].mxu0
        %1776 = vmatprep.mubr.bf16.mxu0 0
        %1777 = vmatmul.mubr.bf16.gmra.mrb[0].mxu0 %v1728
        %v1778 = vpop.f32.mrb[0].mxu0
        %v1779 = vadd.f32 0.0, %v1778
        %v1780 = vpop.f32.mrb[0].mxu0
        %v1781 = vpop.f32.mrb[0].mxu0
        %v1782 = vadd.f32 0.0, %v1781
        %v1783 = vpop.f32.mrb[0].mxu0
        %1784 = vmatprep.mubr.bf16.mxu0 0
        %1785 = vmatmul.mubr.bf16.gmra.mrb[0].mxu0 %v1731
        %v1786 = vpop.f32.mrb[0].mxu0
        %v1787 = vadd.f32 0.0, %v1786
        %v1788 = vpop.f32.mrb[0].mxu0
        %v1789 = vpop.f32.mrb[0].mxu0
        %v1790 = vadd.f32 0.0, %v1789
        %v1791 = vpop.f32.mrb[0].mxu0
        %1792 = vmatprep.mubr.bf16.mxu0 0
        %1793 = vmatmul.mubr.bf16.gmra.mrb[0].mxu0 %v1734
        %v1794 = vpop.f32.mrb[0].mxu0
        %v1795 = vadd.f32 0.0, %v1794
        %v1796 = vpop.f32.mrb[0].mxu0
        %v1797 = vpop.f32.mrb[0].mxu0
        %v1798 = vadd.f32 0.0, %v1797
        %v1799 = vpop.f32.mrb[0].mxu0
        %1800 = vdwg.mxu0
        %v1809 = vunpack.c.l.b16 %v1688
        %v1810 = vunpack.c.l.b16 %v1689
        %v1811 = vunpack.c.l.b16 %v1690
        %v1812 = vunpack.c.l.b16 %v1691
        %v1813 = vunpack.c.l.b16 %v1692
        %v1814 = vunpack.c.l.b16 %v1693
        %v1815 = vunpack.c.l.b16 %v1694
        %v1816 = vunpack.c.l.b16 %v1695
        %v1817 = vpack.c.b16 %v1810, %v1809
        %v1818 = vpack.c.b16 %v1812, %v1811
        %v1819 = vpack.c.b16 %v1814, %v1813
        %v1820 = vpack.c.b16 %v1816, %v1815
        %vm1821 = vcmask 326656
        %v1823 = vsel %vm1821, %v1817, 0
        %v1826 = vsel %vm1821, %v1818, 0
        %v1829 = vsel %vm1821, %v1819, 0
        %v1832 = vsel %vm1821, %v1820, 0
        %vm1834 = vcmask 1043456
        %v1836 = vsel %vm1834, %v1687, 0
        %1838 = vmatprep.subr.bf16.mxu0 0
        %1839 = vmatpush1.bf16.msra.mxu0 %v1685
        %1840 = vmatprep.subr.bf16.mxu0 0
        %1841 = vmatpush1.bf16.msra.mxu0 %v1686
        %1842 = vmatprep.subr.bf16.mxu0 0
        %1843 = vmatpush1.bf16.msra.mxu0 %v1836
        %1844 = vmatprep.subr.bf16.mxu0 0
        %1845 = vmatpush1.bf16.msra.mxu0 0
        %1846 = vmatprep.subr.bf16.mxu0 0
        %1847 = vmatpush1.bf16.msra.mxu0 0
        %1848 = vmatprep.subr.bf16.mxu0 0
        %1849 = vmatpush1.bf16.msra.mxu0 0
        %1850 = vmatprep.subr.bf16.mxu0 0
        %1851 = vmatpush1.bf16.msra.mxu0 0
        %1852 = vmatprep.subr.bf16.mxu0 0
        %1853 = vmatpush1.bf16.msra.mxu0 0
        %1854 = vmatprep.subr.bf16.mxu0 0
        %1855 = vmatpush1.bf16.msra.mxu0 0
        %1856 = vmatprep.subr.bf16.mxu0 0
        %1857 = vmatpush1.bf16.msra.mxu0 0
        %1858 = vmatprep.subr.bf16.mxu0 0
        %1859 = vmatpush1.bf16.msra.mxu0 0
        %1860 = vmatprep.subr.bf16.mxu0 0
        %1861 = vmatpush1.bf16.msra.mxu0 0
        %1862 = vmatprep.subr.bf16.mxu0 0
        %1863 = vmatpush1.bf16.msra.mxu0 0
        %1864 = vmatprep.subr.bf16.mxu0 0
        %1865 = vmatpush1.bf16.msra.mxu0 0
        %1866 = vmatprep.subr.bf16.mxu0 0
        %1867 = vmatpush1.bf16.msra.mxu0 0
        %1868 = vmatprep.subr.bf16.mxu0 0
        %1869 = vmatpush1.bf16.msra.mxu0 0
        %1870 = vmatprep.mubr.bf16.mxu0 0
        %1871 = vmatmul.mubr.bf16.gmra.mrb[0].mxu0 %v1823
        %v1872 = vpop.f32.mrb[0].mxu0
        %v1873 = vadd.f32 %v1771, %v1872
        %v1874 = vpop.f32.mrb[0].mxu0
        %v1875 = vpop.f32.mrb[0].mxu0
        %v1876 = vadd.f32 %v1774, %v1875
        %v1877 = vpop.f32.mrb[0].mxu0
        %1878 = vmatprep.mubr.bf16.mxu0 0
        %1879 = vmatmul.mubr.bf16.gmra.mrb[0].mxu0 %v1826
        %v1880 = vpop.f32.mrb[0].mxu0
        %v1881 = vadd.f32 %v1779, %v1880
        %v1882 = vpop.f32.mrb[0].mxu0
        %v1883 = vpop.f32.mrb[0].mxu0
        %v1884 = vadd.f32 %v1782, %v1883
        %v1885 = vpop.f32.mrb[0].mxu0
        %1886 = vmatprep.mubr.bf16.mxu0 0
        %1887 = vmatmul.mubr.bf16.gmra.mrb[0].mxu0 %v1829
        %v1888 = vpop.f32.mrb[0].mxu0
        %v1889 = vadd.f32 %v1787, %v1888
        %v1890 = vpop.f32.mrb[0].mxu0
        %v1891 = vpop.f32.mrb[0].mxu0
        %v1892 = vadd.f32 %v1790, %v1891
        %v1893 = vpop.f32.mrb[0].mxu0
        %1894 = vmatprep.mubr.bf16.mxu0 0
        %1895 = vmatmul.mubr.bf16.gmra.mrb[0].mxu0 %v1832
        %v1896 = vpop.f32.mrb[0].mxu0
        %v1897 = vadd.f32 %v1795, %v1896
        %v1898 = vpop.f32.mrb[0].mxu0
        %v1899 = vpop.f32.mrb[0].mxu0
        %v1900 = vadd.f32 %v1798, %v1899
        %v1901 = vpop.f32.mrb[0].mxu0
        %1902 = vdwg.mxu0
        %v1903 = vld [vmem:[%s9] sm:$0xf]
        %v1904 = vld [vmem:[%s9 + $0x4] sm:$0xf]
        %v1905 = vld [vmem:[%s9 + $0x8] sm:$0xf]
        %v1906 = vld [vmem:[%s9 + $0xc] sm:$0xf]
        %v1907 = vld [vmem:[%s9 + $0x10] sm:$0xf]
        %v1908 = vld [vmem:[%s9 + $0x14] sm:$0xf]
        %v1909 = vld [vmem:[%s9 + $0x18] sm:$0xf]
        %v1910 = vld [vmem:[%s9 + $0x1c] sm:$0xf]
        %v1919 = vunpack.c.l.b16 %v1903
        %v1920 = vunpack.c.l.b16 %v1904
        %v1921 = vunpack.c.l.b16 %v1905
        %v1922 = vunpack.c.l.b16 %v1906
        %v1923 = vunpack.c.l.b16 %v1907
        %v1924 = vunpack.c.l.b16 %v1908
        %v1925 = vunpack.c.l.b16 %v1909
        %v1926 = vunpack.c.l.b16 %v1910
        %v1927 = vpack.c.b16 %v1920, %v1919
        %v1928 = vpack.c.b16 %v1922, %v1921
        %v1929 = vpack.c.b16 %v1924, %v1923
        %v1930 = vpack.c.b16 %v1926, %v1925
        %v1932 = vsel %vm1015, %v1927, 0
        %v1935 = vsel %vm1015, %v1928, 0
        %v1938 = vsel %vm1015, %v1929, 0
        %v1941 = vsel %vm1015, %v1930, 0
        %1943 = vmatprep.subr.bf16.mxu0 0
        %1944 = vmatpush1.bf16.msra.mxu0 %v977
        %1945 = vmatprep.subr.bf16.mxu0 0
        %1946 = vmatpush1.bf16.msra.mxu0 0
        %1947 = vmatprep.subr.bf16.mxu0 0
        %1948 = vmatpush1.bf16.msra.mxu0 0
        %1949 = vmatprep.subr.bf16.mxu0 0
        %1950 = vmatpush1.bf16.msra.mxu0 0
        %1951 = vmatprep.subr.bf16.mxu0 0
        %1952 = vmatpush1.bf16.msra.mxu0 0
        %1953 = vmatprep.subr.bf16.mxu0 0
        %1954 = vmatpush1.bf16.msra.mxu0 0
        %1955 = vmatprep.subr.bf16.mxu0 0
        %1956 = vmatpush1.bf16.msra.mxu0 0
        %1957 = vmatprep.subr.bf16.mxu0 0
        %1958 = vmatpush1.bf16.msra.mxu0 0
        %1959 = vmatprep.subr.bf16.mxu0 0
        %1960 = vmatpush1.bf16.msra.mxu0 0
        %1961 = vmatprep.subr.bf16.mxu0 0
        %1962 = vmatpush1.bf16.msra.mxu0 0
        %1963 = vmatprep.subr.bf16.mxu0 0
        %1964 = vmatpush1.bf16.msra.mxu0 0
        %1965 = vmatprep.subr.bf16.mxu0 0
        %1966 = vmatpush1.bf16.msra.mxu0 0
        %1967 = vmatprep.subr.bf16.mxu0 0
        %1968 = vmatpush1.bf16.msra.mxu0 0
        %1969 = vmatprep.subr.bf16.mxu0 0
        %1970 = vmatpush1.bf16.msra.mxu0 0
        %1971 = vmatprep.subr.bf16.mxu0 0
        %1972 = vmatpush1.bf16.msra.mxu0 0
        %1973 = vmatprep.subr.bf16.mxu0 0
        %1974 = vmatpush1.bf16.msra.mxu0 0
        %1975 = vmatprep.mubr.bf16.mxu0 0
        %1976 = vmatmul.mubr.bf16.gmra.mrb[0].mxu0 %v1932
        %v1977 = vpop.f32.mrb[0].mxu0
        %v1978 = vadd.f32 0.0, %v1977
        %v1979 = vpop.f32.mrb[0].mxu0
        %v1980 = vpop.f32.mrb[0].mxu0
        %v1981 = vadd.f32 0.0, %v1980
        %v1982 = vpop.f32.mrb[0].mxu0
        %1983 = vmatprep.mubr.bf16.mxu0 0
        %1984 = vmatmul.mubr.bf16.gmra.mrb[0].mxu0 %v1935
        %v1985 = vpop.f32.mrb[0].mxu0
        %v1986 = vadd.f32 0.0, %v1985
        %v1987 = vpop.f32.mrb[0].mxu0
        %v1988 = vpop.f32.mrb[0].mxu0
        %v1989 = vadd.f32 0.0, %v1988
        %v1990 = vpop.f32.mrb[0].mxu0
        %1991 = vmatprep.mubr.bf16.mxu0 0
        %1992 = vmatmul.mubr.bf16.gmra.mrb[0].mxu0 %v1938
        %v1993 = vpop.f32.mrb[0].mxu0
        %v1994 = vadd.f32 0.0, %v1993
        %v1995 = vpop.f32.mrb[0].mxu0
        %v1996 = vpop.f32.mrb[0].mxu0
        %v1997 = vadd.f32 0.0, %v1996
        %v1998 = vpop.f32.mrb[0].mxu0
        %1999 = vmatprep.mubr.bf16.mxu0 0
        %2000 = vmatmul.mubr.bf16.gmra.mrb[0].mxu0 %v1941
        %v2001 = vpop.f32.mrb[0].mxu0
        %v2002 = vadd.f32 0.0, %v2001
        %v2003 = vpop.f32.mrb[0].mxu0
        %v2004 = vpop.f32.mrb[0].mxu0
        %v2005 = vadd.f32 0.0, %v2004
        %v2006 = vpop.f32.mrb[0].mxu0
        %2007 = vdwg.mxu0
        %v2008 = vadd.f32 %v1873, %v1978
        %v2009 = vadd.f32 %v1876, %v1981
        %v2010 = vadd.f32 %v1881, %v1986
        %v2011 = vadd.f32 %v1884, %v1989
        %v2012 = vadd.f32 %v1889, %v1994
        %v2013 = vadd.f32 %v1892, %v1997
        %v2014 = vadd.f32 %v1897, %v2002
        %v2015 = vadd.f32 %v1900, %v2005
        %v2016 = vld [vmem:[%s10] sm:$0xf]
        %v2017 = vld [vmem:[%s10 + $0x4] sm:$0xf]
        %v2018 = vld [vmem:[%s10 + $0x8] sm:$0xf]
        %v2019 = vld [vmem:[%s10 + $0xc] sm:$0xf]
        %v2020 = vld [vmem:[%s10 + $0x10] sm:$0xf]
        %v2021 = vld [vmem:[%s10 + $0x14] sm:$0xf]
        %v2022 = vld [vmem:[%s10 + $0x18] sm:$0xf]
        %v2023 = vld [vmem:[%s10 + $0x1c] sm:$0xf]
        %v2032 = vunpack.c.l.b16 %v2016
        %v2033 = vunpack.c.l.b16 %v2017
        %v2034 = vunpack.c.l.b16 %v2018
        %v2035 = vunpack.c.l.b16 %v2019
        %v2036 = vunpack.c.l.b16 %v2020
        %v2037 = vunpack.c.l.b16 %v2021
        %v2038 = vunpack.c.l.b16 %v2022
        %v2039 = vunpack.c.l.b16 %v2023
        %v2040 = vpack.c.b16 %v2033, %v2032
        %v2041 = vpack.c.b16 %v2035, %v2034
        %v2042 = vpack.c.b16 %v2037, %v2036
        %v2043 = vpack.c.b16 %v2039, %v2038
        %v2045 = vsel %vm1015, %v2040, 0
        %v2048 = vsel %vm1015, %v2041, 0
        %v2051 = vsel %vm1015, %v2042, 0
        %v2054 = vsel %vm1015, %v2043, 0
        %2056 = vmatprep.subr.bf16.mxu0 0
        %2057 = vmatpush1.bf16.msra.mxu0 %v978
        %2058 = vmatprep.subr.bf16.mxu0 0
        %2059 = vmatpush1.bf16.msra.mxu0 0
        %2060 = vmatprep.subr.bf16.mxu0 0
        %2061 = vmatpush1.bf16.msra.mxu0 0
        %2062 = vmatprep.subr.bf16.mxu0 0
        %2063 = vmatpush1.bf16.msra.mxu0 0
        %2064 = vmatprep.subr.bf16.mxu0 0
        %2065 = vmatpush1.bf16.msra.mxu0 0
        %2066 = vmatprep.subr.bf16.mxu0 0
        %2067 = vmatpush1.bf16.msra.mxu0 0
        %2068 = vmatprep.subr.bf16.mxu0 0
        %2069 = vmatpush1.bf16.msra.mxu0 0
        %2070 = vmatprep.subr.bf16.mxu0 0
        %2071 = vmatpush1.bf16.msra.mxu0 0
        %2072 = vmatprep.subr.bf16.mxu0 0
        %2073 = vmatpush1.bf16.msra.mxu0 0
        %2074 = vmatprep.subr.bf16.mxu0 0
        %2075 = vmatpush1.bf16.msra.mxu0 0
        %2076 = vmatprep.subr.bf16.mxu0 0
        %2077 = vmatpush1.bf16.msra.mxu0 0
        %2078 = vmatprep.subr.bf16.mxu0 0
        %2079 = vmatpush1.bf16.msra.mxu0 0
        %2080 = vmatprep.subr.bf16.mxu0 0
        %2081 = vmatpush1.bf16.msra.mxu0 0
        %2082 = vmatprep.subr.bf16.mxu0 0
        %2083 = vmatpush1.bf16.msra.mxu0 0
        %2084 = vmatprep.subr.bf16.mxu0 0
        %2085 = vmatpush1.bf16.msra.mxu0 0
        %2086 = vmatprep.subr.bf16.mxu0 0
        %2087 = vmatpush1.bf16.msra.mxu0 0
        %2088 = vmatprep.mubr.bf16.mxu0 0
        %2089 = vmatmul.mubr.bf16.gmra.mrb[0].mxu0 %v2045
        %v2090 = vpop.f32.mrb[0].mxu0
        %v2091 = vadd.f32 0.0, %v2090
        %v2092 = vpop.f32.mrb[0].mxu0
        %v2093 = vpop.f32.mrb[0].mxu0
        %v2094 = vadd.f32 0.0, %v2093
        %v2095 = vpop.f32.mrb[0].mxu0
        %2096 = vmatprep.mubr.bf16.mxu0 0
        %2097 = vmatmul.mubr.bf16.gmra.mrb[0].mxu0 %v2048
        %v2098 = vpop.f32.mrb[0].mxu0
        %v2099 = vadd.f32 0.0, %v2098
        %v2100 = vpop.f32.mrb[0].mxu0
        %v2101 = vpop.f32.mrb[0].mxu0
        %v2102 = vadd.f32 0.0, %v2101
        %v2103 = vpop.f32.mrb[0].mxu0
        %2104 = vmatprep.mubr.bf16.mxu0 0
        %2105 = vmatmul.mubr.bf16.gmra.mrb[0].mxu0 %v2051
        %v2106 = vpop.f32.mrb[0].mxu0
        %v2107 = vadd.f32 0.0, %v2106
        %v2108 = vpop.f32.mrb[0].mxu0
        %v2109 = vpop.f32.mrb[0].mxu0
        %v2110 = vadd.f32 0.0, %v2109
        %v2111 = vpop.f32.mrb[0].mxu0
        %2112 = vmatprep.mubr.bf16.mxu0 0
        %2113 = vmatmul.mubr.bf16.gmra.mrb[0].mxu0 %v2054
        %v2114 = vpop.f32.mrb[0].mxu0
        %v2115 = vadd.f32 0.0, %v2114
        %v2116 = vpop.f32.mrb[0].mxu0
        %v2117 = vpop.f32.mrb[0].mxu0
        %v2118 = vadd.f32 0.0, %v2117
        %v2119 = vpop.f32.mrb[0].mxu0
        %2120 = vdwg.mxu0
        %v2121 = vadd.f32 %v2008, %v2091
        %v2122 = vadd.f32 %v2009, %v2094
        %v2123 = vadd.f32 %v2010, %v2099
        %v2124 = vadd.f32 %v2011, %v2102
        %v2125 = vadd.f32 %v2012, %v2107
        %v2126 = vadd.f32 %v2013, %v2110
        %v2127 = vadd.f32 %v2014, %v2115
        %v2128 = vadd.f32 %v2015, %v2118
        %v2129 = vld [vmem:[%s11] sm:$0xff]
        %v2130 = vld [vmem:[%s11 + $0x8] sm:$0xff]
        %v2131 = vld [vmem:[%s11 + $0x10] sm:$0xff]
        %v2132 = vld [vmem:[%s11 + $0x18] sm:$0xff]
        %v2133 = vld [vmem:[%s11 + $0x20] sm:$0xff]
        %v2134 = vld [vmem:[%s11 + $0x28] sm:$0xff]
        %v2135 = vld [vmem:[%s11 + $0x30] sm:$0xff]
        %v2136 = vld [vmem:[%s11 + $0x38] sm:$0xff]
        %2138 = vset.pattern.permute.xlu0 0
        %2139 = vperm.xlu0 %2138, %v2129
        %v2140 = vpop.permute.xlu0 %2139
        %2143 = vset.pattern.permute.xlu0 0
        %2144 = vperm.xlu0 %2143, %v2130
        %v2145 = vpop.permute.xlu0 %2144
        %2148 = vset.pattern.permute.xlu0 0
        %2149 = vperm.xlu0 %2148, %v2131
        %v2150 = vpop.permute.xlu0 %2149
        %2153 = vset.pattern.permute.xlu0 0
        %2154 = vperm.xlu0 %2153, %v2132
        %v2155 = vpop.permute.xlu0 %2154
        %2158 = vset.pattern.permute.xlu0 0
        %2159 = vperm.xlu0 %2158, %v2133
        %v2160 = vpop.permute.xlu0 %2159
        %2163 = vset.pattern.permute.xlu0 0
        %2164 = vperm.xlu0 %2163, %v2134
        %v2165 = vpop.permute.xlu0 %2164
        %2168 = vset.pattern.permute.xlu0 0
        %2169 = vperm.xlu0 %2168, %v2135
        %v2170 = vpop.permute.xlu0 %2169
        %2173 = vset.pattern.permute.xlu0 0
        %2174 = vperm.xlu0 %2173, %v2136
        %v2175 = vpop.permute.xlu0 %2174
        %v2177 = vadd.f32 %v2121, %v2140
        %v2178 = vadd.f32 %v2122, %v2145
        %v2179 = vadd.f32 %v2123, %v2150
        %v2180 = vadd.f32 %v2124, %v2155
        %v2181 = vadd.f32 %v2125, %v2160
        %v2182 = vadd.f32 %v2126, %v2165
        %v2183 = vadd.f32 %v2127, %v2170
        %v2184 = vadd.f32 %v2128, %v2175
        %v2185 = vmul.f32 %v2177, 100.0
        %v2186 = vmul.f32 %v2178, 100.0
        %v2187 = vmul.f32 %v2179, 100.0
        %v2188 = vmul.f32 %v2180, 100.0
        %v2189 = vmul.f32 %v2181, 100.0
        %v2190 = vmul.f32 %v2182, 100.0
        %v2191 = vmul.f32 %v2183, 100.0
        %v2192 = vmul.f32 %v2184, 100.0
        %v2193 = vmin.f32 %v2185, 20.0
        %v2194 = vmin.f32 %v2186, 20.0
        %v2195 = vmin.f32 %v2187, 20.0
        %v2196 = vmin.f32 %v2188, 20.0
        %v2197 = vmin.f32 %v2189, 20.0
        %v2198 = vmin.f32 %v2190, 20.0
        %v2199 = vmin.f32 %v2191, 20.0
        %v2200 = vmin.f32 %v2192, 20.0
        %vm2201 = vcmp.gt.f32.partialorder %v2185, 20.0
        %vm2202 = vcmp.gt.f32.partialorder %v2186, 20.0
        %vm2203 = vcmp.gt.f32.partialorder %v2187, 20.0
        %vm2204 = vcmp.gt.f32.partialorder %v2188, 20.0
        %vm2205 = vcmp.gt.f32.partialorder %v2189, 20.0
        %vm2206 = vcmp.gt.f32.partialorder %v2190, 20.0
        %vm2207 = vcmp.gt.f32.partialorder %v2191, 20.0
        %vm2208 = vcmp.gt.f32.partialorder %v2192, 20.0
        %v2209 = vmul.f32 %v2193, 1.442695
        %v2210 = vpow.pop %v2209
        %v2211 = vmul.f32 %v2194, 1.442695
        %v2212 = vpow.pop %v2211
        %v2213 = vmul.f32 %v2195, 1.442695
        %v2214 = vpow.pop %v2213
        %v2215 = vmul.f32 %v2196, 1.442695
        %v2216 = vpow.pop %v2215
        %v2217 = vmul.f32 %v2197, 1.442695
        %v2218 = vpow.pop %v2217
        %v2219 = vmul.f32 %v2198, 1.442695
        %v2220 = vpow.pop %v2219
        %v2221 = vmul.f32 %v2199, 1.442695
        %v2222 = vpow.pop %v2221
        %v2223 = vmul.f32 %v2200, 1.442695
        %v2224 = vpow.pop %v2223
        %v2225 = vadd.f32 %v2210, 1.0
        %v2226 = vlog2.pop %v2225
        %v2227 = vmul.f32 %v2226, 0.6931472
        %v2228 = vmul.f32 -0.5, %v2210
        %v2229 = vadd.f32 %v2228, 1.0
        %v2230 = vmul.f32 %v2229, %v2210
        %v2231 = vand.u32 2147483647, %v2210
        %vm2232 = vcmp.lt.f32.partialorder %v2231, 0.0004427343
        %v2233 = vsel %vm2232, %v2230, %v2227
        %v2234 = vadd.f32 %v2212, 1.0
        %v2235 = vlog2.pop %v2234
        %v2236 = vmul.f32 %v2235, 0.6931472
        %v2237 = vmul.f32 -0.5, %v2212
        %v2238 = vadd.f32 %v2237, 1.0
        %v2239 = vmul.f32 %v2238, %v2212
        %v2240 = vand.u32 2147483647, %v2212
        %vm2241 = vcmp.lt.f32.partialorder %v2240, 0.0004427343
        %v2242 = vsel %vm2241, %v2239, %v2236
        %v2243 = vadd.f32 %v2214, 1.0
        %v2244 = vlog2.pop %v2243
        %v2245 = vmul.f32 %v2244, 0.6931472
        %v2246 = vmul.f32 -0.5, %v2214
        %v2247 = vadd.f32 %v2246, 1.0
        %v2248 = vmul.f32 %v2247, %v2214
        %v2249 = vand.u32 2147483647, %v2214
        %vm2250 = vcmp.lt.f32.partialorder %v2249, 0.0004427343
        %v2251 = vsel %vm2250, %v2248, %v2245
        %v2252 = vadd.f32 %v2216, 1.0
        %v2253 = vlog2.pop %v2252
        %v2254 = vmul.f32 %v2253, 0.6931472
        %v2255 = vmul.f32 -0.5, %v2216
        %v2256 = vadd.f32 %v2255, 1.0
        %v2257 = vmul.f32 %v2256, %v2216
        %v2258 = vand.u32 2147483647, %v2216
        %vm2259 = vcmp.lt.f32.partialorder %v2258, 0.0004427343
        %v2260 = vsel %vm2259, %v2257, %v2254
        %v2261 = vadd.f32 %v2218, 1.0
        %v2262 = vlog2.pop %v2261
        %v2263 = vmul.f32 %v2262, 0.6931472
        %v2264 = vmul.f32 -0.5, %v2218
        %v2265 = vadd.f32 %v2264, 1.0
        %v2266 = vmul.f32 %v2265, %v2218
        %v2267 = vand.u32 2147483647, %v2218
        %vm2268 = vcmp.lt.f32.partialorder %v2267, 0.0004427343
        %v2269 = vsel %vm2268, %v2266, %v2263
        %v2270 = vadd.f32 %v2220, 1.0
        %v2271 = vlog2.pop %v2270
        %v2272 = vmul.f32 %v2271, 0.6931472
        %v2273 = vmul.f32 -0.5, %v2220
        %v2274 = vadd.f32 %v2273, 1.0
        %v2275 = vmul.f32 %v2274, %v2220
        %v2276 = vand.u32 2147483647, %v2220
        %vm2277 = vcmp.lt.f32.partialorder %v2276, 0.0004427343
        %v2278 = vsel %vm2277, %v2275, %v2272
        %v2279 = vadd.f32 %v2222, 1.0
        %v2280 = vlog2.pop %v2279
        %v2281 = vmul.f32 %v2280, 0.6931472
        %v2282 = vmul.f32 -0.5, %v2222
        %v2283 = vadd.f32 %v2282, 1.0
        %v2284 = vmul.f32 %v2283, %v2222
        %v2285 = vand.u32 2147483647, %v2222
        %vm2286 = vcmp.lt.f32.partialorder %v2285, 0.0004427343
        %v2287 = vsel %vm2286, %v2284, %v2281
        %v2288 = vadd.f32 %v2224, 1.0
        %v2289 = vlog2.pop %v2288
        %v2290 = vmul.f32 %v2289, 0.6931472
        %v2291 = vmul.f32 -0.5, %v2224
        %v2292 = vadd.f32 %v2291, 1.0
        %v2293 = vmul.f32 %v2292, %v2224
        %v2294 = vand.u32 2147483647, %v2224
        %vm2295 = vcmp.lt.f32.partialorder %v2294, 0.0004427343
        %v2296 = vsel %vm2295, %v2293, %v2290
        %v2297 = vmul.f32 %v2233, 0.01
        %v2298 = vmul.f32 %v2242, 0.01
        %v2299 = vmul.f32 %v2251, 0.01
        %v2300 = vmul.f32 %v2260, 0.01
        %v2301 = vmul.f32 %v2269, 0.01
        %v2302 = vmul.f32 %v2278, 0.01
        %v2303 = vmul.f32 %v2287, 0.01
        %v2304 = vmul.f32 %v2296, 0.01
        %v2305 = vsel %vm2201, %v2177, %v2297
        %v2306 = vsel %vm2202, %v2178, %v2298
        %v2307 = vsel %vm2203, %v2179, %v2299
        %v2308 = vsel %vm2204, %v2180, %v2300
        %v2309 = vsel %vm2205, %v2181, %v2301
        %v2310 = vsel %vm2206, %v2182, %v2302
        %v2311 = vsel %vm2207, %v2183, %v2303
        %v2312 = vsel %vm2208, %v2184, %v2304
        %v2313 = vpack.c.bf16 %v2306, %v2305
        %v2314 = vpack.c.bf16 %v2308, %v2307
        %v2315 = vpack.c.bf16 %v2310, %v2309
        %v2316 = vpack.c.bf16 %v2312, %v2311
        %v2317 = vld [vmem:[%s12] sm:$0xf]
        %v2318 = vld [vmem:[%s12 + $0x4] sm:$0xf]
        %v2319 = vld [vmem:[%s12 + $0x8] sm:$0xf]
        %v2320 = vld [vmem:[%s12 + $0xc] sm:$0xf]
        %v2321 = vld [vmem:[%s12 + $0x10] sm:$0xf]
        %v2322 = vld [vmem:[%s12 + $0x14] sm:$0xf]
        %v2323 = vld [vmem:[%s12 + $0x18] sm:$0xf]
        %v2324 = vld [vmem:[%s12 + $0x1c] sm:$0xf]
        %v2325 = vld [vmem:[%s13] sm:$0xff]
        %v2326 = vld [vmem:[%s13 + $0x8] sm:$0xff]
        %v2327 = vld [vmem:[%s13 + $0x10] sm:$0xff]
        %v2328 = vld [vmem:[%s13 + $0x18] sm:$0xff]
        %v2329 = vld [vmem:[%s13 + $0x20] sm:$0xff]
        %v2330 = vld [vmem:[%s13 + $0x28] sm:$0xff]
        %v2331 = vld [vmem:[%s13 + $0x30] sm:$0xff]
        %v2332 = vld [vmem:[%s13 + $0x38] sm:$0xff]
        %2334 = vset.pattern.permute.xlu0 0
        %2335 = vperm.xlu0 %2334, %v2325
        %v2336 = vpop.permute.xlu0 %2335
        %2339 = vset.pattern.permute.xlu0 0
        %2340 = vperm.xlu0 %2339, %v2326
        %v2341 = vpop.permute.xlu0 %2340
        %2344 = vset.pattern.permute.xlu0 0
        %2345 = vperm.xlu0 %2344, %v2327
        %v2346 = vpop.permute.xlu0 %2345
        %2349 = vset.pattern.permute.xlu0 0
        %2350 = vperm.xlu0 %2349, %v2328
        %v2351 = vpop.permute.xlu0 %2350
        %2354 = vset.pattern.permute.xlu0 0
        %2355 = vperm.xlu0 %2354, %v2329
        %v2356 = vpop.permute.xlu0 %2355
        %2359 = vset.pattern.permute.xlu0 0
        %2360 = vperm.xlu0 %2359, %v2330
        %v2361 = vpop.permute.xlu0 %2360
        %2364 = vset.pattern.permute.xlu0 0
        %2365 = vperm.xlu0 %2364, %v2331
        %v2366 = vpop.permute.xlu0 %2365
        %2369 = vset.pattern.permute.xlu0 0
        %2370 = vperm.xlu0 %2369, %v2332
        %v2371 = vpop.permute.xlu0 %2370
        %v2381 = vunpack.c.l.b16 %v2317
        %v2382 = vunpack.c.l.b16 %v2318
        %v2383 = vunpack.c.l.b16 %v2319
        %v2384 = vunpack.c.l.b16 %v2320
        %v2385 = vunpack.c.l.b16 %v2321
        %v2386 = vunpack.c.l.b16 %v2322
        %v2387 = vunpack.c.l.b16 %v2323
        %v2388 = vunpack.c.l.b16 %v2324
        %v2389 = vpack.c.b16 %v2382, %v2381
        %v2390 = vpack.c.b16 %v2384, %v2383
        %v2391 = vpack.c.b16 %v2386, %v2385
        %v2392 = vpack.c.b16 %v2388, %v2387
        %v2394 = vsel %vm1539, %v2389, 0
        %v2397 = vsel %vm1539, %v2390, 0
        %v2400 = vsel %vm1539, %v2391, 0
        %v2403 = vsel %vm1539, %v2392, 0
        %2405 = vmatprep.subr.bf16.mxu0 0
        %2406 = vmatpush1.bf16.msra.mxu0 %v2313
        %2407 = vmatprep.subr.bf16.mxu0 0
        %2408 = vmatpush1.bf16.msra.mxu0 %v2314
        %2409 = vmatprep.subr.bf16.mxu0 0
        %2410 = vmatpush1.bf16.msra.mxu0 %v2315
        %2411 = vmatprep.subr.bf16.mxu0 0
        %2412 = vmatpush1.bf16.msra.mxu0 %v2316
        %2413 = vmatprep.subr.bf16.mxu0 0
        %2414 = vmatpush1.bf16.msra.mxu0 0
        %2415 = vmatprep.subr.bf16.mxu0 0
        %2416 = vmatpush1.bf16.msra.mxu0 0
        %2417 = vmatprep.subr.bf16.mxu0 0
        %2418 = vmatpush1.bf16.msra.mxu0 0
        %2419 = vmatprep.subr.bf16.mxu0 0
        %2420 = vmatpush1.bf16.msra.mxu0 0
        %2421 = vmatprep.subr.bf16.mxu0 0
        %2422 = vmatpush1.bf16.msra.mxu0 0
        %2423 = vmatprep.subr.bf16.mxu0 0
        %2424 = vmatpush1.bf16.msra.mxu0 0
        %2425 = vmatprep.subr.bf16.mxu0 0
        %2426 = vmatpush1.bf16.msra.mxu0 0
        %2427 = vmatprep.subr.bf16.mxu0 0
        %2428 = vmatpush1.bf16.msra.mxu0 0
        %2429 = vmatprep.subr.bf16.mxu0 0
        %2430 = vmatpush1.bf16.msra.mxu0 0
        %2431 = vmatprep.subr.bf16.mxu0 0
        %2432 = vmatpush1.bf16.msra.mxu0 0
        %2433 = vmatprep.subr.bf16.mxu0 0
        %2434 = vmatpush1.bf16.msra.mxu0 0
        %2435 = vmatprep.subr.bf16.mxu0 0
        %2436 = vmatpush1.bf16.msra.mxu0 0
        %2437 = vmatprep.mubr.bf16.mxu0 0
        %2438 = vmatmul.mubr.bf16.gmra.mrb[0].mxu0 %v2394
        %v2439 = vpop.f32.mrb[0].mxu0
        %v2440 = vadd.f32 %v2336, %v2439
        %v2441 = vpop.f32.mrb[0].mxu0
        %v2442 = vpop.f32.mrb[0].mxu0
        %v2443 = vadd.f32 %v2341, %v2442
        %v2444 = vpop.f32.mrb[0].mxu0
        %2445 = vmatprep.mubr.bf16.mxu0 0
        %2446 = vmatmul.mubr.bf16.gmra.mrb[0].mxu0 %v2397
        %v2447 = vpop.f32.mrb[0].mxu0
        %v2448 = vadd.f32 %v2346, %v2447
        %v2449 = vpop.f32.mrb[0].mxu0
        %v2450 = vpop.f32.mrb[0].mxu0
        %v2451 = vadd.f32 %v2351, %v2450
        %v2452 = vpop.f32.mrb[0].mxu0
        %2453 = vmatprep.mubr.bf16.mxu0 0
        %2454 = vmatmul.mubr.bf16.gmra.mrb[0].mxu0 %v2400
        %v2455 = vpop.f32.mrb[0].mxu0
        %v2456 = vadd.f32 %v2356, %v2455
        %v2457 = vpop.f32.mrb[0].mxu0
        %v2458 = vpop.f32.mrb[0].mxu0
        %v2459 = vadd.f32 %v2361, %v2458
        %v2460 = vpop.f32.mrb[0].mxu0
        %2461 = vmatprep.mubr.bf16.mxu0 0
        %2462 = vmatmul.mubr.bf16.gmra.mrb[0].mxu0 %v2403
        %v2463 = vpop.f32.mrb[0].mxu0
        %v2464 = vadd.f32 %v2366, %v2463
        %v2465 = vpop.f32.mrb[0].mxu0
        %v2466 = vpop.f32.mrb[0].mxu0
        %v2467 = vadd.f32 %v2371, %v2466
        %v2468 = vpop.f32.mrb[0].mxu0
        %2469 = vdwg.mxu0
        %v2470 = vmul.f32 %v2440, 100.0
        %v2471 = vmul.f32 %v2443, 100.0
        %v2472 = vmul.f32 %v2448, 100.0
        %v2473 = vmul.f32 %v2451, 100.0
        %v2474 = vmul.f32 %v2456, 100.0
        %v2475 = vmul.f32 %v2459, 100.0
        %v2476 = vmul.f32 %v2464, 100.0
        %v2477 = vmul.f32 %v2467, 100.0
        %v2478 = vmin.f32 %v2470, 20.0
        %v2479 = vmin.f32 %v2471, 20.0
        %v2480 = vmin.f32 %v2472, 20.0
        %v2481 = vmin.f32 %v2473, 20.0
        %v2482 = vmin.f32 %v2474, 20.0
        %v2483 = vmin.f32 %v2475, 20.0
        %v2484 = vmin.f32 %v2476, 20.0
        %v2485 = vmin.f32 %v2477, 20.0
        %vm2486 = vcmp.gt.f32.partialorder %v2470, 20.0
        %vm2487 = vcmp.gt.f32.partialorder %v2471, 20.0
        %vm2488 = vcmp.gt.f32.partialorder %v2472, 20.0
        %vm2489 = vcmp.gt.f32.partialorder %v2473, 20.0
        %vm2490 = vcmp.gt.f32.partialorder %v2474, 20.0
        %vm2491 = vcmp.gt.f32.partialorder %v2475, 20.0
        %vm2492 = vcmp.gt.f32.partialorder %v2476, 20.0
        %vm2493 = vcmp.gt.f32.partialorder %v2477, 20.0
        %v2494 = vmul.f32 %v2478, 1.442695
        %v2495 = vpow.pop %v2494
        %v2496 = vmul.f32 %v2479, 1.442695
        %v2497 = vpow.pop %v2496
        %v2498 = vmul.f32 %v2480, 1.442695
        %v2499 = vpow.pop %v2498
        %v2500 = vmul.f32 %v2481, 1.442695
        %v2501 = vpow.pop %v2500
        %v2502 = vmul.f32 %v2482, 1.442695
        %v2503 = vpow.pop %v2502
        %v2504 = vmul.f32 %v2483, 1.442695
        %v2505 = vpow.pop %v2504
        %v2506 = vmul.f32 %v2484, 1.442695
        %v2507 = vpow.pop %v2506
        %v2508 = vmul.f32 %v2485, 1.442695
        %v2509 = vpow.pop %v2508
        %v2510 = vadd.f32 %v2495, 1.0
        %v2511 = vlog2.pop %v2510
        %v2512 = vmul.f32 %v2511, 0.6931472
        %v2513 = vmul.f32 -0.5, %v2495
        %v2514 = vadd.f32 %v2513, 1.0
        %v2515 = vmul.f32 %v2514, %v2495
        %v2516 = vand.u32 2147483647, %v2495
        %vm2517 = vcmp.lt.f32.partialorder %v2516, 0.0004427343
        %v2518 = vsel %vm2517, %v2515, %v2512
        %v2519 = vadd.f32 %v2497, 1.0
        %v2520 = vlog2.pop %v2519
        %v2521 = vmul.f32 %v2520, 0.6931472
        %v2522 = vmul.f32 -0.5, %v2497
        %v2523 = vadd.f32 %v2522, 1.0
        %v2524 = vmul.f32 %v2523, %v2497
        %v2525 = vand.u32 2147483647, %v2497
        %vm2526 = vcmp.lt.f32.partialorder %v2525, 0.0004427343
        %v2527 = vsel %vm2526, %v2524, %v2521
        %v2528 = vadd.f32 %v2499, 1.0
        %v2529 = vlog2.pop %v2528
        %v2530 = vmul.f32 %v2529, 0.6931472
        %v2531 = vmul.f32 -0.5, %v2499
        %v2532 = vadd.f32 %v2531, 1.0
        %v2533 = vmul.f32 %v2532, %v2499
        %v2534 = vand.u32 2147483647, %v2499
        %vm2535 = vcmp.lt.f32.partialorder %v2534, 0.0004427343
        %v2536 = vsel %vm2535, %v2533, %v2530
        %v2537 = vadd.f32 %v2501, 1.0
        %v2538 = vlog2.pop %v2537
        %v2539 = vmul.f32 %v2538, 0.6931472
        %v2540 = vmul.f32 -0.5, %v2501
        %v2541 = vadd.f32 %v2540, 1.0
        %v2542 = vmul.f32 %v2541, %v2501
        %v2543 = vand.u32 2147483647, %v2501
        %vm2544 = vcmp.lt.f32.partialorder %v2543, 0.0004427343
        %v2545 = vsel %vm2544, %v2542, %v2539
        %v2546 = vadd.f32 %v2503, 1.0
        %v2547 = vlog2.pop %v2546
        %v2548 = vmul.f32 %v2547, 0.6931472
        %v2549 = vmul.f32 -0.5, %v2503
        %v2550 = vadd.f32 %v2549, 1.0
        %v2551 = vmul.f32 %v2550, %v2503
        %v2552 = vand.u32 2147483647, %v2503
        %vm2553 = vcmp.lt.f32.partialorder %v2552, 0.0004427343
        %v2554 = vsel %vm2553, %v2551, %v2548
        %v2555 = vadd.f32 %v2505, 1.0
        %v2556 = vlog2.pop %v2555
        %v2557 = vmul.f32 %v2556, 0.6931472
        %v2558 = vmul.f32 -0.5, %v2505
        %v2559 = vadd.f32 %v2558, 1.0
        %v2560 = vmul.f32 %v2559, %v2505
        %v2561 = vand.u32 2147483647, %v2505
        %vm2562 = vcmp.lt.f32.partialorder %v2561, 0.0004427343
        %v2563 = vsel %vm2562, %v2560, %v2557
        %v2564 = vadd.f32 %v2507, 1.0
        %v2565 = vlog2.pop %v2564
        %v2566 = vmul.f32 %v2565, 0.6931472
        %v2567 = vmul.f32 -0.5, %v2507
        %v2568 = vadd.f32 %v2567, 1.0
        %v2569 = vmul.f32 %v2568, %v2507
        %v2570 = vand.u32 2147483647, %v2507
        %vm2571 = vcmp.lt.f32.partialorder %v2570, 0.0004427343
        %v2572 = vsel %vm2571, %v2569, %v2566
        %v2573 = vadd.f32 %v2509, 1.0
        %v2574 = vlog2.pop %v2573
        %v2575 = vmul.f32 %v2574, 0.6931472
        %v2576 = vmul.f32 -0.5, %v2509
        %v2577 = vadd.f32 %v2576, 1.0
        %v2578 = vmul.f32 %v2577, %v2509
        %v2579 = vand.u32 2147483647, %v2509
        %vm2580 = vcmp.lt.f32.partialorder %v2579, 0.0004427343
        %v2581 = vsel %vm2580, %v2578, %v2575
        %v2582 = vmul.f32 %v2518, 0.01
        %v2583 = vmul.f32 %v2527, 0.01
        %v2584 = vmul.f32 %v2536, 0.01
        %v2585 = vmul.f32 %v2545, 0.01
        %v2586 = vmul.f32 %v2554, 0.01
        %v2587 = vmul.f32 %v2563, 0.01
        %v2588 = vmul.f32 %v2572, 0.01
        %v2589 = vmul.f32 %v2581, 0.01
        %v2590 = vsel %vm2486, %v2440, %v2582
        %v2591 = vsel %vm2487, %v2443, %v2583
        %v2592 = vsel %vm2488, %v2448, %v2584
        %v2593 = vsel %vm2489, %v2451, %v2585
        %v2594 = vsel %vm2490, %v2456, %v2586
        %v2595 = vsel %vm2491, %v2459, %v2587
        %v2596 = vsel %vm2492, %v2464, %v2588
        %v2597 = vsel %vm2493, %v2467, %v2589
        %v2598 = vld [vmem:[%s14] sm:$0x1]
        %v2599 = vld [vmem:[#allocation2] sm:$0x1]
        %2601 = vset.pattern.permute.xlu0 0
        %2602 = vperm.xlu0 %2601, %v2599
        %v2603 = vpop.permute.xlu0 %2602
        %v2605 = vlaneseq
        %v2606 = vshrl.u32 %v2605, 7
        %v2607 = vsub.s32 0, %v2606
        %v2608 = vrot.slane %v2603, %v2607
        %v2610 = vsel %vm1539, %v2598, 0
        %2612 = vmatprep.subr.mxu0 0.0
        %2613 = vmatpush1.msra.mxu0 %v2590
        %2614 = vmatprep.subr.mxu0 0.0
        %2615 = vmatpush1.msra.mxu0 %v2591
        %2616 = vmatprep.subr.mxu0 0.0
        %2617 = vmatpush1.msra.mxu0 %v2592
        %2618 = vmatprep.subr.mxu0 0.0
        %2619 = vmatpush1.msra.mxu0 %v2593
        %2620 = vmatprep.subr.mxu0 0.0
        %2621 = vmatpush1.msra.mxu0 %v2594
        %2622 = vmatprep.subr.mxu0 0.0
        %2623 = vmatpush1.msra.mxu0 %v2595
        %2624 = vmatprep.subr.mxu0 0.0
        %2625 = vmatpush1.msra.mxu0 %v2596
        %2626 = vmatprep.subr.mxu0 0.0
        %2627 = vmatpush1.msra.mxu0 %v2597
        %2628 = vmatprep.subr.mxu0 0.0
        %2629 = vmatpush1.msra.mxu0 0.0
        %2630 = vmatprep.subr.mxu0 0.0
        %2631 = vmatpush1.msra.mxu0 0.0
        %2632 = vmatprep.subr.mxu0 0.0
        %2633 = vmatpush1.msra.mxu0 0.0
        %2634 = vmatprep.subr.mxu0 0.0
        %2635 = vmatpush1.msra.mxu0 0.0
        %2636 = vmatprep.subr.mxu0 0.0
        %2637 = vmatpush1.msra.mxu0 0.0
        %2638 = vmatprep.subr.mxu0 0.0
        %2639 = vmatpush1.msra.mxu0 0.0
        %2640 = vmatprep.subr.mxu0 0.0
        %2641 = vmatpush1.msra.mxu0 0.0
        %2642 = vmatprep.subr.mxu0 0.0
        %2643 = vmatpush1.msra.mxu0 0.0
        %2644 = vmatprep.subr.mxu0 0.0
        %2645 = vmatpush1.msra.mxu0 0.0
        %2646 = vmatprep.subr.mxu0 0.0
        %2647 = vmatpush1.msra.mxu0 0.0
        %2648 = vmatprep.subr.mxu0 0.0
        %2649 = vmatpush1.msra.mxu0 0.0
        %2650 = vmatprep.subr.mxu0 0.0
        %2651 = vmatpush1.msra.mxu0 0.0
        %2652 = vmatprep.subr.mxu0 0.0
        %2653 = vmatpush1.msra.mxu0 0.0
        %2654 = vmatprep.subr.mxu0 0.0
        %2655 = vmatpush1.msra.mxu0 0.0
        %2656 = vmatprep.subr.mxu0 0.0
        %2657 = vmatpush1.msra.mxu0 0.0
        %2658 = vmatprep.subr.mxu0 0.0
        %2659 = vmatpush1.msra.mxu0 0.0
        %2660 = vmatprep.subr.mxu0 0.0
        %2661 = vmatpush1.msra.mxu0 0.0
        %2662 = vmatprep.subr.mxu0 0.0
        %2663 = vmatpush1.msra.mxu0 0.0
        %2664 = vmatprep.subr.mxu0 0.0
        %2665 = vmatpush1.msra.mxu0 0.0
        %2666 = vmatprep.subr.mxu0 0.0
        %2667 = vmatpush1.msra.mxu0 0.0
        %2668 = vmatprep.subr.mxu0 0.0
        %2669 = vmatpush1.msra.mxu0 0.0
        %2670 = vmatprep.subr.mxu0 0.0
        %2671 = vmatpush1.msra.mxu0 0.0
        %2672 = vmatprep.subr.mxu0 0.0
        %2673 = vmatpush1.msra.mxu0 0.0
        %2674 = vmatprep.subr.mxu0 0.0
        %2675 = vmatpush1.msra.mxu0 0.0
        %2676 = vmatprep.mubr.f32.mxu0 0.0
        %2677 = vmatmul.mubr.f32.gmra.mrb[0].mxu0 %v2610
        %v2678 = vpop.f32.mrb[0].mxu0
        %v2679 = vadd.f32 %v2608, %v2678
        %v2680 = vpop.f32.mrb[0].mxu0
        %2681 = vdwg.mxu0
        %2682 = vst [vmem:[%s558] sm:$0x1] %v2679
        %s2683 = sand.u32 %s381, 1
        %s2684 = scalar_lea.sflag [#allocation5], %s2683
        %s2685 = sand.u32 %s381, 1
        %s2686 = scalar_lea.vmem [#allocation4], %s2685
        // Predicated region
        $region123: #{tpu_custom_call.1} parent=117 // pred_check
          %p2687 = pneg %p391
        $region124: #{tpu_custom_call.1} parent=117 // pred_check_branch
          %2689 = sbr.rel (%p2687) target = $region126
        $region125: #{tpu_custom_call.1} parent=117 // pred_region
          %s2691 = ssub.s32 16, 16
          %2692 = vsyncadd %s2684, %s2691
          %s2693 = smul.addr %s32, 16
          %s2694 = scalar_lea.hbm %s16, %s2693
          %s2696 = sshll.u32 %s2686, 4
          %s2697 = int_to_ptr.vmem [resolvable:$true] %s2696
          %2699 = dma.vmem_to_hbm [thread:$0]  %s2697, 16, %s2694, %s2684
        $region126: #{tpu_custom_call.1} parent=117 // pred_fallthru
          _
      $region118: #{tpu_custom_call.1} parent=5 // pred_fallthru
        _
      %p2700 = scmp.le.s32.totalorder 2, %s27
      // Predicated region
      $region127: #{tpu_custom_call.1} parent=5 // pred_check
        %p2701 = pneg %p2700
      $region128: #{tpu_custom_call.1} parent=5 // pred_check_branch
        %2703 = sbr.rel (%p2701) target = $region130
      $region129: #{tpu_custom_call.1} parent=5 // pred_region
        %s2704 = ssub.s32 %s27, 2
        // Predicated region
        $region131: #{tpu_custom_call.1} parent=129 // pred_check
          %p2705 = pneg %p397
        $region132: #{tpu_custom_call.1} parent=129 // pred_check_branch
          %2707 = sbr.rel (%p2705) target = $region134
        $region133: #{tpu_custom_call.1} parent=129 // pred_region
          %s2708 = sand.u32 %s382, 1
          %s2709 = scalar_lea.sflag [#allocation5], %s2708
          %s2710 = sand.u32 %s382, 1
          %s2711 = scalar_lea.vmem [#allocation4], %s2710
          %2712 = dma.done %s2709, 16
        $region134: #{tpu_custom_call.1} parent=129 // pred_fallthru
          _
      $region130: #{tpu_custom_call.1} parent=5 // pred_fallthru
        _
    $region6: #{tpu_custom_call.1} parent=1 // loop_footer
      %s31 = sadd.s32 1, %s27
    $region7: #{tpu_custom_call.1} parent=1 // loop_footer_branch
      %26 = sbr.rel target = $region3
    $region8: #{tpu_custom_call.1} parent=1 // loop_exit
      _
    %2713 = vsyncpa [#allocation5], 1
    %s2714 = scalar_lea.sflag [#allocation5], 1
    %2715 = vsyncpa %s2714, 1

</llo_original>
